<compile_context>
chip_gen: v7x
topology: tpu7x:2x2x1
jax: 0.10.0
libtpu: 0.0.40
codegen_flags: <defaults>
</compile_context>

<pallas_src>
import functools
import math

import numpy as np
import jax
import jax.numpy as jnp
from jax import lax
from jax.experimental import pallas as pl
from jax.experimental.pallas import tpu as pltpu

BN_EPS = 1e-5
LANE = 128


# ----------------------------------------------------------------------------
# helpers
# ----------------------------------------------------------------------------
def _round_up(x, m):
    return (x + m - 1) // m * m


def _pick_row_tile(h_out, target=8):
    t = min(h_out, target)
    while h_out % t:
        t -= 1
    return t


def _act(y, kind):
    if kind == "relu":
        return jnp.maximum(y, 0.0)
    if kind == "hswish":
        return y * jnp.clip(y + 3.0, 0.0, 6.0) * (1.0 / 6.0)
    return y


def adjust_feature_order(a, groups=2):
    idx = []
    for i in range(groups):
        for k in range(a):
            if k % groups == i:
                idx.append(k)
    return idx


def _pad2(w, r, c):
    return jnp.pad(w, ((0, r - w.shape[0]), (0, c - w.shape[1])))


def _pad1(v, c):
    return jnp.pad(v, (0, c - v.shape[0])).reshape(1, c).astype(jnp.float32)


# ----------------------------------------------------------------------------
# fused bottleneck kernel
# ----------------------------------------------------------------------------
def _bottleneck_kernel(x_hbm, exp_w, exp_s, exp_b, dw_w, dw_s, dw_b,
                       pw_w, pw_s, pw_b, o_ref,
                       x_vmem, e_vmem, dma_sem, *,
                       k, stride, pad, H, W, th_out, w_out, rows_in, wp,
                       act, residual):
    n = pl.program_id(0)
    t = pl.program_id(1)
    row0 = pl.multiple_of(t * (th_out * stride), th_out * stride)

    # ---- fetch the input row slab (with spatial halo) HBM -> VMEM ----------
    cp = pltpu.make_async_copy(x_hbm.at[n, pl.ds(row0, rows_in)], x_vmem, dma_sem)
    cp.start()
    cp.wait()

    cin_p = x_vmem.shape[-1]
    cexp_p = e_vmem.shape[-1]

    # ---- expansion 1x1 conv (+BN+act), bf16 MXU / f32 epilogue -------------
    xs = x_vmem[...]                                          # (rows_in, wp, cin_p) bf16
    e = jnp.dot(xs.reshape(rows_in * wp, cin_p), exp_w[...],
                preferred_element_type=jnp.float32)           # (rows_in*wp, cexp_p)
    e = _act(e * exp_s[...] + exp_b[...], act)
    e = e.reshape(rows_in, wp, cexp_p)

    # Zero the spatial halo so it exactly matches the zero-padding the
    # depthwise conv sees in PyTorch (bias/act of padded pixels must not leak).
    rg = row0 + lax.broadcasted_iota(jnp.int32, (rows_in, wp, 1), 0)
    cg = lax.broadcasted_iota(jnp.int32, (rows_in, wp, 1), 1)
    valid = (rg >= pad) & (rg < pad + H) & (cg >= pad) & (cg < pad + W)
    e_vmem[...] = jnp.where(valid, e, 0.0)

    # ---- depthwise kxk conv (+BN+act): tap-by-tap f32 accumulation ---------
    acc = jnp.zeros((th_out, w_out, cexp_p), jnp.float32)
    for tap in range(k * k):
        dy, dx = tap // k, tap % k
        if stride == 1:
            sl = e_vmem[pl.ds(dy, th_out), pl.ds(dx, w_out), :]
        else:
            sl = e_vmem[pl.ds(dy, th_out, stride=stride),
                        pl.ds(dx, w_out, stride=stride), :]
        acc = acc + sl * dw_w[tap]                            # dw_w[tap]: (1, cexp_p)
    acc = _act(acc * dw_s[...] + dw_b[...], act)

    # ---- pointwise 1x1 conv (+BN+act), bf16 MXU / f32 epilogue -------------
    y = jnp.dot(acc.reshape(th_out * w_out, cexp_p).astype(jnp.bfloat16),
                pw_w[...], preferred_element_type=jnp.float32)
    y = _act(y * pw_s[...] + pw_b[...], act)

    if residual:
        xr = x_vmem[pl.ds(pad, th_out), pl.ds(pad, w_out), :]
        y = y + xr.astype(jnp.float32).reshape(th_out * w_out, cin_p)

    o_ref[...] = y.reshape(o_ref.shape)


# ----------------------------------------------------------------------------
# wrapper
# ----------------------------------------------------------------------------
def bottleneck_forward(params, x_nchw, *, cfg):
    k = cfg["kernel"]
    stride = cfg["stride"]
    pad = (k - 1) // 2
    act = cfg["act"]
    residual = cfg["residual"]

    N, cin, H, W = x_nchw.shape
    cexp = params["exp_w"].shape[1]
    cout = params["pw_w"].shape[1]
    cin_p, cexp_p, cout_p = (_round_up(c, LANE) for c in (cin, cexp, cout))

    h_out = (H + 2 * pad - k) // stride + 1
    w_out = (W + 2 * pad - k) // stride + 1
    th_out = _pick_row_tile(h_out)
    n_tiles = h_out // th_out
    rows_in = (th_out - 1) * stride + k
    wp = _round_up(W + 2 * pad, 8)

    # NCHW -> NHWC, bf16, zero spatial halo + zero channel padding (lane-dense).
    x = jnp.transpose(x_nchw, (0, 2, 3, 1)).astype(jnp.bfloat16)
    x = jnp.pad(x, ((0, 0), (pad, pad), (pad, wp - W - pad), (0, cin_p - cin)))

    # --- pad / cast parameters ----------------------------------------------
    exp_w = _pad2(params["exp_w"], cin_p, cexp_p).astype(jnp.bfloat16)
    pw_w_eff = params["pw_w"]
    if cfg["sort"]:
        # y[:, new_order] @ W  ==  y @ W[argsort(new_order)]
        inv = np.argsort(np.asarray(cfg["new_order"]))
        pw_w_eff = pw_w_eff[inv]
    pw_w = _pad2(pw_w_eff, cexp_p, cout_p).astype(jnp.bfloat16)
    dw_w = jnp.pad(params["dw_w"], ((0, 0), (0, 0), (0, cexp_p - cexp)))
    exp_s, exp_b = (_pad1(v, cexp_p) for v in params["exp_bn"])
    dw_s, dw_b = (_pad1(v, cexp_p) for v in params["dw_bn"])
    pw_s, pw_b = (_pad1(v, cout_p) for v in params["pw_bn"])

    kernel = functools.partial(
        _bottleneck_kernel, k=k, stride=stride, pad=pad, H=H, W=W,
        th_out=th_out, w_out=w_out, rows_in=rows_in, wp=wp,
        act=act, residual=residual)

    # rough per-step working set -> explicit scoped-VMEM limit (v7x-safe).
    vmem_bytes = (
        2 * rows_in * wp * cin_p * 2                      # input slab (bf16)
        + rows_in * wp * cexp_p * 4                       # expanded activation
        + 2 * (cin_p * cexp_p + cexp_p * cout_p) * 2      # 1x1 weights (bf16)
        + k * k * cexp_p * 4                              # dw weights
        + 2 * th_out * w_out * cout_p * 4                 # output block
        + 4 * th_out * w_out * cexp_p * 4                 # dw/pw live values
    )
    vmem_limit = int(min(32 * 1024 * 1024, max(8 * 1024 * 1024, 4 * vmem_bytes)))

    grid_spec = pltpu.PrefetchScalarGridSpec(
        num_scalar_prefetch=0,
        grid=(N, n_tiles),
        in_specs=[
            pl.BlockSpec(memory_space=pl.ANY),                       # x stays in HBM
            pl.BlockSpec((cin_p, cexp_p), lambda n, t: (0, 0)),      # exp_w
            pl.BlockSpec((1, cexp_p), lambda n, t: (0, 0)),          # exp scale
            pl.BlockSpec((1, cexp_p), lambda n, t: (0, 0)),          # exp bias
            pl.BlockSpec((k * k, 1, cexp_p), lambda n, t: (0, 0, 0)),  # dw_w
            pl.BlockSpec((1, cexp_p), lambda n, t: (0, 0)),          # dw scale
            pl.BlockSpec((1, cexp_p), lambda n, t: (0, 0)),          # dw bias
            pl.BlockSpec((cexp_p, cout_p), lambda n, t: (0, 0)),     # pw_w
            pl.BlockSpec((1, cout_p), lambda n, t: (0, 0)),          # pw scale
            pl.BlockSpec((1, cout_p), lambda n, t: (0, 0)),          # pw bias
        ],
        out_specs=pl.BlockSpec((1, th_out, w_out, cout_p),
                               lambda n, t: (n, t, 0, 0)),
        scratch_shapes=[
            pltpu.VMEM((rows_in, wp, cin_p), jnp.bfloat16),          # input slab
            pltpu.VMEM((rows_in, wp, cexp_p), jnp.float32),          # expanded act
            pltpu.SemaphoreType.DMA(()),
        ],
    )

    out = pl.pallas_call(
        kernel,
        out_shape=jax.ShapeDtypeStruct((N, h_out, w_out, cout_p), jnp.float32),
        grid_spec=grid_spec,
        compiler_params=pltpu.CompilerParams(
            dimension_semantics=("parallel", "parallel"),
            vmem_limit_bytes=vmem_limit),
    )(x, exp_w, exp_s, exp_b, dw_w, dw_s, dw_b, pw_w, pw_s, pw_b)

    y = out[:, :, :, :cout]
    return jnp.transpose(y, (0, 3, 1, 2))                   # NHWC -> NCHW


# ----------------------------------------------------------------------------
# parameters + pure-JAX reference (for a correctness sanity check)
# ----------------------------------------------------------------------------
def init_bottleneck(key, cfg):
    cin = cfg["in_channels"]
    cout = cfg["out_channels"]
    cexp = int(cin * cfg["exp_rate"])
    groups = cfg["groups"]
    k = cfg["kernel"]
    keys = jax.random.split(key, 6)

    def bn(kk, c):
        kg, kb, km, kv = jax.random.split(kk, 4)
        gamma = 1.0 + 0.2 * jax.random.normal(kg, (c,), jnp.float32)
        beta = 0.1 * jax.random.normal(kb, (c,), jnp.float32)
        mean = 0.1 * jax.random.normal(km, (c,), jnp.float32)
        var = 0.5 + jax.random.uniform(kv, (c,), jnp.float32)
        scale = gamma * lax.rsqrt(var + BN_EPS)
        return scale, beta - mean * scale

    # grouped 1x1 expansion conv == block-diagonal dense (cin, cexp) matmul.
    w = jax.random.normal(keys[0], (cin, cexp), jnp.float32) * math.sqrt(2.0 / cexp)
    gi, go = cin // groups, cexp // groups
    mask = np.zeros((cin, cexp), np.float32)
    for g in range(groups):
        mask[g * gi:(g + 1) * gi, g * go:(g + 1) * go] = 1.0
    return {
        "exp_w": w * jnp.asarray(mask),
        "exp_bn": bn(keys[1], cexp),
        "dw_w": jax.random.normal(keys[2], (k * k, 1, cexp), jnp.float32)
                * math.sqrt(2.0 / (k * k)),
        "dw_bn": bn(keys[3], cexp),
        "pw_w": jax.random.normal(keys[4], (cexp, cout), jnp.float32)
                * math.sqrt(2.0 / cout),
        "pw_bn": bn(keys[5], cout),
    }


def bottleneck_reference(params, x_nchw, *, cfg):
    k = cfg["kernel"]
    stride = cfg["stride"]
    pad = (k - 1) // 2
    act = cfg["act"]
    N, cin, H, W = x_nchw.shape
    x = jnp.transpose(x_nchw, (0, 2, 3, 1))
    xq = x.astype(jnp.bfloat16).astype(jnp.float32)      # kernel quantizes input to bf16

    es, eb = params["exp_bn"]
    y = jnp.dot(xq.reshape(-1, cin).astype(jnp.bfloat16),
                params["exp_w"].astype(jnp.bfloat16),
                preferred_element_type=jnp.float32)
    y = _act(y * es + eb, act)
    cexp = y.shape[-1]
    y = y.reshape(N, H, W, cexp)

    yp = jnp.pad(y, ((0, 0), (pad, pad), (pad, pad), (0, 0)))
    ho = (H + 2 * pad - k) // stride + 1
    wo = (W + 2 * pad - k) // stride + 1
    acc = jnp.zeros((N, ho, wo, cexp), jnp.float32)
    for dy in range(k):
        for dx in range(k):
            tap = yp[:, dy:dy + stride * ho:stride, dx:dx + stride * wo:stride, :]
            acc = acc + tap * params["dw_w"][dy * k + dx, 0]
    dsc, dbi = params["dw_bn"]
    z = _act(acc * dsc + dbi, act)

    if cfg["sort"]:
        z = z[..., jnp.asarray(cfg["new_order"])]

    ps, pb = params["pw_bn"]
    o = jnp.dot(z.reshape(-1, cexp).astype(jnp.bfloat16),
                params["pw_w"].astype(jnp.bfloat16),
                preferred_element_type=jnp.float32)
    o = _act(o * ps + pb, act).reshape(N, ho, wo, -1)
    if cfg["residual"]:
        o = o + xq
    return jnp.transpose(o, (0, 3, 1, 2))


# ----------------------------------------------------------------------------
# main
# ----------------------------------------------------------------------------
if __name__ == "__main__":
    key = jax.random.PRNGKey(0)
    k0, k1, k2, k3 = jax.random.split(key, 4)

    configs = [
        dict(in_channels=16, out_channels=32, kernel=3, stride=2, exp_rate=2,
             groups=1, sort=False, residual=False, act="relu"),
        dict(in_channels=32, out_channels=32, kernel=5, stride=1, exp_rate=2,
             groups=2, sort=True, residual=True, act="hswish"),
    ]
    inputs = [jax.random.normal(k1, (2, 16, 16, 16), jnp.float32),
              jax.random.normal(k3, (2, 32, 16, 16), jnp.float32)]
    pkeys = [k0, k2]

    for cfg, x, pk in zip(configs, inputs, pkeys):
        if cfg["sort"]:
            cfg["new_order"] = tuple(
                adjust_feature_order(int(cfg["in_channels"] * cfg["exp_rate"])))
        params = init_bottleneck(pk, cfg)

        fwd = jax.jit(functools.partial(bottleneck_forward, cfg=cfg))
        out = jax.block_until_ready(fwd(params, x))
        ref = jax.block_until_ready(bottleneck_reference(params, x, cfg=cfg))

        assert out.shape == ref.shape, (out.shape, ref.shape)
        err = float(jnp.max(jnp.abs(out - ref)))
        scale = float(jnp.max(jnp.abs(ref))) + 1.0
        assert err <= 1e-2 * scale, f"mismatch: max|diff|={err} (scale {scale})"

    print("KERNEL_OK")
</pallas_src>

<mosaic_0001>
module attributes {stable_mosaic.version = 11 : i64} {
  func.func @_bottleneck_kernel(%arg0: i32, %arg1: i32, %arg2: memref<2x18x24x128xbf16, #tpu.memory_space<any>>, %arg3: memref<128x128xbf16, #tpu.memory_space<vmem>>, %arg4: memref<1x128xf32, #tpu.memory_space<vmem>>, %arg5: memref<1x128xf32, #tpu.memory_space<vmem>>, %arg6: memref<9x1x128xf32, #tpu.memory_space<vmem>>, %arg7: memref<1x128xf32, #tpu.memory_space<vmem>>, %arg8: memref<1x128xf32, #tpu.memory_space<vmem>>, %arg9: memref<128x128xbf16, #tpu.memory_space<vmem>>, %arg10: memref<1x128xf32, #tpu.memory_space<vmem>>, %arg11: memref<1x128xf32, #tpu.memory_space<vmem>>, %arg12: memref<1x8x8x128xf32, #tpu.memory_space<vmem>>, %arg13: memref<17x24x128xbf16, #tpu.memory_space<vmem>>, %arg14: memref<17x24x128xf32, #tpu.memory_space<vmem>>, %arg15: memref<!tpu.dma_semaphore, #tpu.memory_space<semaphore_mem>>) attributes {dimension_semantics = [#tpu.dimension_semantics<parallel>, #tpu.dimension_semantics<parallel>], iteration_bounds = array<i64: 2, 1>, scalar_prefetch = 0 : i64, scratch_operands = 3 : i64, tpu.core_type = #tpu.core_type<tc>, window_params = [{}, {pipeline_mode = #tpu.pipeline_mode<synchronous>, transform_indices = @transform_1, window_bounds = array<i64: 128, 128>}, {pipeline_mode = #tpu.pipeline_mode<synchronous>, transform_indices = @transform_2, window_bounds = array<i64: 1, 128>}, {pipeline_mode = #tpu.pipeline_mode<synchronous>, transform_indices = @transform_3, window_bounds = array<i64: 1, 128>}, {pipeline_mode = #tpu.pipeline_mode<synchronous>, transform_indices = @transform_4, window_bounds = array<i64: 9, 1, 128>}, {pipeline_mode = #tpu.pipeline_mode<synchronous>, transform_indices = @transform_5, window_bounds = array<i64: 1, 128>}, {pipeline_mode = #tpu.pipeline_mode<synchronous>, transform_indices = @transform_6, window_bounds = array<i64: 1, 128>}, {pipeline_mode = #tpu.pipeline_mode<synchronous>, transform_indices = @transform_7, window_bounds = array<i64: 128, 128>}, {pipeline_mode = #tpu.pipeline_mode<synchronous>, transform_indices = @transform_8, window_bounds = array<i64: 1, 128>}, {pipeline_mode = #tpu.pipeline_mode<synchronous>, transform_indices = @transform_9, window_bounds = array<i64: 1, 128>}, {transform_indices = @transform_10, window_bounds = array<i64: 1, 8, 8, 128>}]} {
    %c16_i32 = arith.constant 16 : i32
    %0 = arith.muli %arg1, %c16_i32 : i32
    %1 = tpu.assume_multiple %0, 16 : i32
    %c0_i32 = arith.constant 0 : i32
    %c0_i32_0 = arith.constant 0 : i32
    %2 = tpu.memref_slice %arg2[%arg0, %1, %c0_i32, %c0_i32_0] : memref<2x18x24x128xbf16, #tpu.memory_space<any>> -> memref<1x17x24x128xbf16, #tpu.memory_space<any>>
    %3 = tpu.memref_squeeze %2 : memref<1x17x24x128xbf16, #tpu.memory_space<any>> -> memref<17x24x128xbf16, #tpu.memory_space<any>>
    tpu.enqueue_dma source(%3 : memref<17x24x128xbf16, #tpu.memory_space<any>>) target(%arg13 : memref<17x24x128xbf16, #tpu.memory_space<vmem>>) target_semaphore(%arg15 : memref<!tpu.dma_semaphore, #tpu.memory_space<semaphore_mem>>)
    %c0_i32_1 = arith.constant 0 : i32
    %c0_i32_2 = arith.constant 0 : i32
    %4 = tpu.memref_slice %arg2[%arg0, %1, %c0_i32_1, %c0_i32_2] : memref<2x18x24x128xbf16, #tpu.memory_space<any>> -> memref<1x17x24x128xbf16, #tpu.memory_space<any>>
    %5 = tpu.memref_squeeze %4 : memref<1x17x24x128xbf16, #tpu.memory_space<any>> -> memref<17x24x128xbf16, #tpu.memory_space<any>>
    tpu.wait_dma2 semaphore(%arg15 : memref<!tpu.dma_semaphore, #tpu.memory_space<semaphore_mem>>) src(%5 : memref<17x24x128xbf16, #tpu.memory_space<any>>) dst(%arg13 : memref<17x24x128xbf16, #tpu.memory_space<vmem>>)
    %c0 = arith.constant 0 : index
    %c0_3 = arith.constant 0 : index
    %c0_4 = arith.constant 0 : index
    %6 = vector.load %arg13[%c0, %c0_3, %c0_4] : memref<17x24x128xbf16, #tpu.memory_space<vmem>>, vector<17x24x128xbf16>
    %7 = vector.shape_cast %6 : vector<17x24x128xbf16> to vector<408x128xbf16>
    %c0_5 = arith.constant 0 : index
    %c0_6 = arith.constant 0 : index
    %8 = vector.load %arg3[%c0_5, %c0_6] : memref<128x128xbf16, #tpu.memory_space<vmem>>, vector<128x128xbf16>
    %cst = arith.constant dense<0.000000e+00> : vector<408x128xf32>
    %9 = tpu.matmul %7, %8, %cst {dimension_numbers = #tpu.dot_dimension_numbers<[1], [0], [0], [1], [0, 0, 1, 1], [], []>} : vector<408x128xbf16>, vector<128x128xbf16>, vector<408x128xf32> -> vector<408x128xf32>
    %c0_7 = arith.constant 0 : index
    %c0_8 = arith.constant 0 : index
    %10 = vector.load %arg4[%c0_7, %c0_8] : memref<1x128xf32, #tpu.memory_space<vmem>>, vector<1x128xf32>
    %11 = vector.broadcast %10 : vector<1x128xf32> to vector<408x128xf32>
    %12 = arith.mulf %9, %11 : vector<408x128xf32>
    %c0_9 = arith.constant 0 : index
    %c0_10 = arith.constant 0 : index
    %13 = vector.load %arg5[%c0_9, %c0_10] : memref<1x128xf32, #tpu.memory_space<vmem>>, vector<1x128xf32>
    %14 = vector.broadcast %13 : vector<1x128xf32> to vector<408x128xf32>
    %15 = arith.addf %12, %14 : vector<408x128xf32>
    %cst_11 = arith.constant 0.000000e+00 : f32
    %16 = vector.broadcast %cst_11 : f32 to vector<408x128xf32>
    %17 = arith.maximumf %15, %16 : vector<408x128xf32>
    %18 = vector.shape_cast %17 : vector<408x128xf32> to vector<17x24x128xf32>
    %19 = tpu.iota {dimensions = array<i32: 0>} : vector<17x24x1xi32>
    %20 = vector.broadcast %1 : i32 to vector<17x24x1xi32>
    %21 = arith.addi %20, %19 : vector<17x24x1xi32>
    %22 = tpu.iota {dimensions = array<i32: 1>} : vector<17x24x1xi32>
    %c1_i32 = arith.constant 1 : i32
    %23 = vector.broadcast %c1_i32 : i32 to vector<17x24x1xi32>
    %24 = arith.cmpi sge, %21, %23 : vector<17x24x1xi32>
    %c17_i32 = arith.constant 17 : i32
    %25 = vector.broadcast %c17_i32 : i32 to vector<17x24x1xi32>
    %26 = arith.cmpi slt, %21, %25 : vector<17x24x1xi32>
    %27 = arith.andi %24, %26 : vector<17x24x1xi1>
    %c1_i32_12 = arith.constant 1 : i32
    %28 = vector.broadcast %c1_i32_12 : i32 to vector<17x24x1xi32>
    %29 = arith.cmpi sge, %22, %28 : vector<17x24x1xi32>
    %30 = arith.andi %27, %29 : vector<17x24x1xi1>
    %c17_i32_13 = arith.constant 17 : i32
    %31 = vector.broadcast %c17_i32_13 : i32 to vector<17x24x1xi32>
    %32 = arith.cmpi slt, %22, %31 : vector<17x24x1xi32>
    %33 = arith.andi %30, %32 : vector<17x24x1xi1>
    %cst_14 = arith.constant 0.000000e+00 : f32
    %34 = vector.shape_cast %33 : vector<17x24x1xi1> to vector<17x24x1xi1>
    %35 = vector.broadcast %34 : vector<17x24x1xi1> to vector<17x24x128xi1>
    %36 = vector.broadcast %cst_14 : f32 to vector<17x24x128xf32>
    %37 = arith.select %35, %18, %36 : vector<17x24x128xi1>, vector<17x24x128xf32>
    %c0_15 = arith.constant 0 : index
    %c0_16 = arith.constant 0 : index
    %c0_17 = arith.constant 0 : index
    %38 = vector.load %arg14[%c0_15, %c0_16, %c0_17] : memref<17x24x128xf32, #tpu.memory_space<vmem>>, vector<17x24x128xf32>
    tpu.vector_store %arg14[%c0_15, %c0_16, %c0_17], %37 {strides = array<i32>} : memref<17x24x128xf32, #tpu.memory_space<vmem>>, vector<17x24x128xf32>,
    %cst_18 = arith.constant 0.000000e+00 : f32
    %39 = vector.broadcast %cst_18 : f32 to vector<8x8x128xf32>
    %c0_19 = arith.constant 0 : index
    %c0_20 = arith.constant 0 : index
    %c0_21 = arith.constant 0 : index
    %40 = tpu.strided_load %arg14[%c0_19, %c0_20, %c0_21] {strides = array<i32: 2, 2, 1>} : memref<17x24x128xf32, #tpu.memory_space<vmem>>, vector<8x8x128xf32>
    %c0_22 = arith.constant 0 : index
    %c0_23 = arith.constant 0 : index
    %c0_24 = arith.constant 0 : index
    %41 = vector.load %arg6[%c0_22, %c0_23, %c0_24] : memref<9x1x128xf32, #tpu.memory_space<vmem>>, vector<1x1x128xf32>
    %42 = vector.shape_cast %41 : vector<1x1x128xf32> to vector<1x128xf32>
    %43 = vector.shape_cast %42 : vector<1x128xf32> to vector<1x1x128xf32>
    %44 = vector.broadcast %43 : vector<1x1x128xf32> to vector<8x8x128xf32>
    %45 = arith.mulf %40, %44 : vector<8x8x128xf32>
    %46 = arith.addf %39, %45 : vector<8x8x128xf32>
    %c0_25 = arith.constant 0 : index
    %c1 = arith.constant 1 : index
    %c0_26 = arith.constant 0 : index
    %47 = tpu.strided_load %arg14[%c0_25, %c1, %c0_26] {strides = array<i32: 2, 2, 1>} : memref<17x24x128xf32, #tpu.memory_space<vmem>>, vector<8x8x128xf32>
    %c1_27 = arith.constant 1 : index
    %c0_28 = arith.constant 0 : index
    %c0_29 = arith.constant 0 : index
    %48 = vector.load %arg6[%c1_27, %c0_28, %c0_29] : memref<9x1x128xf32, #tpu.memory_space<vmem>>, vector<1x1x128xf32>
    %49 = vector.shape_cast %48 : vector<1x1x128xf32> to vector<1x128xf32>
    %50 = vector.shape_cast %49 : vector<1x128xf32> to vector<1x1x128xf32>
    %51 = vector.broadcast %50 : vector<1x1x128xf32> to vector<8x8x128xf32>
    %52 = arith.mulf %47, %51 : vector<8x8x128xf32>
    %53 = arith.addf %46, %52 : vector<8x8x128xf32>
    %c0_30 = arith.constant 0 : index
    %c2 = arith.constant 2 : index
    %c0_31 = arith.constant 0 : index
    %54 = tpu.strided_load %arg14[%c0_30, %c2, %c0_31] {strides = array<i32: 2, 2, 1>} : memref<17x24x128xf32, #tpu.memory_space<vmem>>, vector<8x8x128xf32>
    %c2_32 = arith.constant 2 : index
    %c0_33 = arith.constant 0 : index
    %c0_34 = arith.constant 0 : index
    %55 = vector.load %arg6[%c2_32, %c0_33, %c0_34] : memref<9x1x128xf32, #tpu.memory_space<vmem>>, vector<1x1x128xf32>
    %56 = vector.shape_cast %55 : vector<1x1x128xf32> to vector<1x128xf32>
    %57 = vector.shape_cast %56 : vector<1x128xf32> to vector<1x1x128xf32>
    %58 = vector.broadcast %57 : vector<1x1x128xf32> to vector<8x8x128xf32>
    %59 = arith.mulf %54, %58 : vector<8x8x128xf32>
    %60 = arith.addf %53, %59 : vector<8x8x128xf32>
    %c1_35 = arith.constant 1 : index
    %c0_36 = arith.constant 0 : index
    %c0_37 = arith.constant 0 : index
    %61 = tpu.strided_load %arg14[%c1_35, %c0_36, %c0_37] {strides = array<i32: 2, 2, 1>} : memref<17x24x128xf32, #tpu.memory_space<vmem>>, vector<8x8x128xf32>
    %c3 = arith.constant 3 : index
    %c0_38 = arith.constant 0 : index
    %c0_39 = arith.constant 0 : index
    %62 = vector.load %arg6[%c3, %c0_38, %c0_39] : memref<9x1x128xf32, #tpu.memory_space<vmem>>, vector<1x1x128xf32>
    %63 = vector.shape_cast %62 : vector<1x1x128xf32> to vector<1x128xf32>
    %64 = vector.shape_cast %63 : vector<1x128xf32> to vector<1x1x128xf32>
    %65 = vector.broadcast %64 : vector<1x1x128xf32> to vector<8x8x128xf32>
    %66 = arith.mulf %61, %65 : vector<8x8x128xf32>
    %67 = arith.addf %60, %66 : vector<8x8x128xf32>
    %c1_40 = arith.constant 1 : index
    %c1_41 = arith.constant 1 : index
    %c0_42 = arith.constant 0 : index
    %68 = tpu.strided_load %arg14[%c1_40, %c1_41, %c0_42] {strides = array<i32: 2, 2, 1>} : memref<17x24x128xf32, #tpu.memory_space<vmem>>, vector<8x8x128xf32>
    %c4 = arith.constant 4 : index
    %c0_43 = arith.constant 0 : index
    %c0_44 = arith.constant 0 : index
    %69 = vector.load %arg6[%c4, %c0_43, %c0_44] : memref<9x1x128xf32, #tpu.memory_space<vmem>>, vector<1x1x128xf32>
    %70 = vector.shape_cast %69 : vector<1x1x128xf32> to vector<1x128xf32>
    %71 = vector.shape_cast %70 : vector<1x128xf32> to vector<1x1x128xf32>
    %72 = vector.broadcast %71 : vector<1x1x128xf32> to vector<8x8x128xf32>
    %73 = arith.mulf %68, %72 : vector<8x8x128xf32>
    %74 = arith.addf %67, %73 : vector<8x8x128xf32>
    %c1_45 = arith.constant 1 : index
    %c2_46 = arith.constant 2 : index
    %c0_47 = arith.constant 0 : index
    %75 = tpu.strided_load %arg14[%c1_45, %c2_46, %c0_47] {strides = array<i32: 2, 2, 1>} : memref<17x24x128xf32, #tpu.memory_space<vmem>>, vector<8x8x128xf32>
    %c5 = arith.constant 5 : index
    %c0_48 = arith.constant 0 : index
    %c0_49 = arith.constant 0 : index
    %76 = vector.load %arg6[%c5, %c0_48, %c0_49] : memref<9x1x128xf32, #tpu.memory_space<vmem>>, vector<1x1x128xf32>
    %77 = vector.shape_cast %76 : vector<1x1x128xf32> to vector<1x128xf32>
    %78 = vector.shape_cast %77 : vector<1x128xf32> to vector<1x1x128xf32>
    %79 = vector.broadcast %78 : vector<1x1x128xf32> to vector<8x8x128xf32>
    %80 = arith.mulf %75, %79 : vector<8x8x128xf32>
    %81 = arith.addf %74, %80 : vector<8x8x128xf32>
    %c2_50 = arith.constant 2 : index
    %c0_51 = arith.constant 0 : index
    %c0_52 = arith.constant 0 : index
    %82 = tpu.strided_load %arg14[%c2_50, %c0_51, %c0_52] {strides = array<i32: 2, 2, 1>} : memref<17x24x128xf32, #tpu.memory_space<vmem>>, vector<8x8x128xf32>
    %c6 = arith.constant 6 : index
    %c0_53 = arith.constant 0 : index
    %c0_54 = arith.constant 0 : index
    %83 = vector.load %arg6[%c6, %c0_53, %c0_54] : memref<9x1x128xf32, #tpu.memory_space<vmem>>, vector<1x1x128xf32>
    %84 = vector.shape_cast %83 : vector<1x1x128xf32> to vector<1x128xf32>
    %85 = vector.shape_cast %84 : vector<1x128xf32> to vector<1x1x128xf32>
    %86 = vector.broadcast %85 : vector<1x1x128xf32> to vector<8x8x128xf32>
    %87 = arith.mulf %82, %86 : vector<8x8x128xf32>
    %88 = arith.addf %81, %87 : vector<8x8x128xf32>
    %c2_55 = arith.constant 2 : index
    %c1_56 = arith.constant 1 : index
    %c0_57 = arith.constant 0 : index
    %89 = tpu.strided_load %arg14[%c2_55, %c1_56, %c0_57] {strides = array<i32: 2, 2, 1>} : memref<17x24x128xf32, #tpu.memory_space<vmem>>, vector<8x8x128xf32>
    %c7 = arith.constant 7 : index
    %c0_58 = arith.constant 0 : index
    %c0_59 = arith.constant 0 : index
    %90 = vector.load %arg6[%c7, %c0_58, %c0_59] : memref<9x1x128xf32, #tpu.memory_space<vmem>>, vector<1x1x128xf32>
    %91 = vector.shape_cast %90 : vector<1x1x128xf32> to vector<1x128xf32>
    %92 = vector.shape_cast %91 : vector<1x128xf32> to vector<1x1x128xf32>
    %93 = vector.broadcast %92 : vector<1x1x128xf32> to vector<8x8x128xf32>
    %94 = arith.mulf %89, %93 : vector<8x8x128xf32>
    %95 = arith.addf %88, %94 : vector<8x8x128xf32>
    %c2_60 = arith.constant 2 : index
    %c2_61 = arith.constant 2 : index
    %c0_62 = arith.constant 0 : index
    %96 = tpu.strided_load %arg14[%c2_60, %c2_61, %c0_62] {strides = array<i32: 2, 2, 1>} : memref<17x24x128xf32, #tpu.memory_space<vmem>>, vector<8x8x128xf32>
    %c8 = arith.constant 8 : index
    %c0_63 = arith.constant 0 : index
    %c0_64 = arith.constant 0 : index
    %97 = vector.load %arg6[%c8, %c0_63, %c0_64] : memref<9x1x128xf32, #tpu.memory_space<vmem>>, vector<1x1x128xf32>
    %98 = vector.shape_cast %97 : vector<1x1x128xf32> to vector<1x128xf32>
    %99 = vector.shape_cast %98 : vector<1x128xf32> to vector<1x1x128xf32>
    %100 = vector.broadcast %99 : vector<1x1x128xf32> to vector<8x8x128xf32>
    %101 = arith.mulf %96, %100 : vector<8x8x128xf32>
    %102 = arith.addf %95, %101 : vector<8x8x128xf32>
    %c0_65 = arith.constant 0 : index
    %c0_66 = arith.constant 0 : index
    %103 = vector.load %arg7[%c0_65, %c0_66] : memref<1x128xf32, #tpu.memory_space<vmem>>, vector<1x128xf32>
    %104 = vector.shape_cast %103 : vector<1x128xf32> to vector<1x1x128xf32>
    %105 = vector.broadcast %104 : vector<1x1x128xf32> to vector<8x8x128xf32>
    %106 = arith.mulf %102, %105 : vector<8x8x128xf32>
    %c0_67 = arith.constant 0 : index
    %c0_68 = arith.constant 0 : index
    %107 = vector.load %arg8[%c0_67, %c0_68] : memref<1x128xf32, #tpu.memory_space<vmem>>, vector<1x128xf32>
    %108 = vector.shape_cast %107 : vector<1x128xf32> to vector<1x1x128xf32>
    %109 = vector.broadcast %108 : vector<1x1x128xf32> to vector<8x8x128xf32>
    %110 = arith.addf %106, %109 : vector<8x8x128xf32>
    %cst_69 = arith.constant 0.000000e+00 : f32
    %111 = vector.broadcast %cst_69 : f32 to vector<8x8x128xf32>
    %112 = arith.maximumf %110, %111 : vector<8x8x128xf32>
    %113 = vector.shape_cast %112 : vector<8x8x128xf32> to vector<64x128xf32>
    %114 = arith.truncf %113 : vector<64x128xf32> to vector<64x128xbf16>
    %c0_70 = arith.constant 0 : index
    %c0_71 = arith.constant 0 : index
    %115 = vector.load %arg9[%c0_70, %c0_71] : memref<128x128xbf16, #tpu.memory_space<vmem>>, vector<128x128xbf16>
    %cst_72 = arith.constant dense<0.000000e+00> : vector<64x128xf32>
    %116 = tpu.matmul %114, %115, %cst_72 {dimension_numbers = #tpu.dot_dimension_numbers<[1], [0], [0], [1], [0, 0, 1, 1], [], []>} : vector<64x128xbf16>, vector<128x128xbf16>, vector<64x128xf32> -> vector<64x128xf32>
    %c0_73 = arith.constant 0 : index
    %c0_74 = arith.constant 0 : index
    %117 = vector.load %arg10[%c0_73, %c0_74] : memref<1x128xf32, #tpu.memory_space<vmem>>, vector<1x128xf32>
    %118 = vector.broadcast %117 : vector<1x128xf32> to vector<64x128xf32>
    %119 = arith.mulf %116, %118 : vector<64x128xf32>
    %c0_75 = arith.constant 0 : index
    %c0_76 = arith.constant 0 : index
    %120 = vector.load %arg11[%c0_75, %c0_76] : memref<1x128xf32, #tpu.memory_space<vmem>>, vector<1x128xf32>
    %121 = vector.broadcast %120 : vector<1x128xf32> to vector<64x128xf32>
    %122 = arith.addf %119, %121 : vector<64x128xf32>
    %cst_77 = arith.constant 0.000000e+00 : f32
    %123 = vector.broadcast %cst_77 : f32 to vector<64x128xf32>
    %124 = arith.maximumf %122, %123 : vector<64x128xf32>
    %125 = vector.shape_cast %124 : vector<64x128xf32> to vector<1x8x8x128xf32>
    %c0_78 = arith.constant 0 : index
    %c0_79 = arith.constant 0 : index
    %c0_80 = arith.constant 0 : index
    %c0_81 = arith.constant 0 : index
    %126 = vector.load %arg12[%c0_78, %c0_79, %c0_80, %c0_81] : memref<1x8x8x128xf32, #tpu.memory_space<vmem>>, vector<1x8x8x128xf32>
    tpu.vector_store %arg12[%c0_78, %c0_79, %c0_80, %c0_81], %125 {strides = array<i32>} : memref<1x8x8x128xf32, #tpu.memory_space<vmem>>, vector<1x8x8x128xf32>,
    return
  }
  func.func @transform_1(%arg0: i32, %arg1: i32) -> (i32, i32) {
    %c0_i32 = arith.constant 0 : i32
    %c0_i32_0 = arith.constant 0 : i32
    %c0_i32_1 = arith.constant 0 : i32
    return %c0_i32, %c0_i32_0 : i32, i32
  }
  func.func @transform_2(%arg0: i32, %arg1: i32) -> (i32, i32) {
    %c0_i32 = arith.constant 0 : i32
    %c0_i32_0 = arith.constant 0 : i32
    %c0_i32_1 = arith.constant 0 : i32
    return %c0_i32, %c0_i32_0 : i32, i32
  }
  func.func @transform_3(%arg0: i32, %arg1: i32) -> (i32, i32) {
    %c0_i32 = arith.constant 0 : i32
    %c0_i32_0 = arith.constant 0 : i32
    %c0_i32_1 = arith.constant 0 : i32
    return %c0_i32, %c0_i32_0 : i32, i32
  }
  func.func @transform_4(%arg0: i32, %arg1: i32) -> (i32, i32, i32) {
    %c0_i32 = arith.constant 0 : i32
    %c0_i32_0 = arith.constant 0 : i32
    %c0_i32_1 = arith.constant 0 : i32
    %c0_i32_2 = arith.constant 0 : i32
    return %c0_i32, %c0_i32_0, %c0_i32_1 : i32, i32, i32
  }
  func.func @transform_5(%arg0: i32, %arg1: i32) -> (i32, i32) {
    %c0_i32 = arith.constant 0 : i32
    %c0_i32_0 = arith.constant 0 : i32
    %c0_i32_1 = arith.constant 0 : i32
    return %c0_i32, %c0_i32_0 : i32, i32
  }
  func.func @transform_6(%arg0: i32, %arg1: i32) -> (i32, i32) {
    %c0_i32 = arith.constant 0 : i32
    %c0_i32_0 = arith.constant 0 : i32
    %c0_i32_1 = arith.constant 0 : i32
    return %c0_i32, %c0_i32_0 : i32, i32
  }
  func.func @transform_7(%arg0: i32, %arg1: i32) -> (i32, i32) {
    %c0_i32 = arith.constant 0 : i32
    %c0_i32_0 = arith.constant 0 : i32
    %c0_i32_1 = arith.constant 0 : i32
    return %c0_i32, %c0_i32_0 : i32, i32
  }
  func.func @transform_8(%arg0: i32, %arg1: i32) -> (i32, i32) {
    %c0_i32 = arith.constant 0 : i32
    %c0_i32_0 = arith.constant 0 : i32
    %c0_i32_1 = arith.constant 0 : i32
    return %c0_i32, %c0_i32_0 : i32, i32
  }
  func.func @transform_9(%arg0: i32, %arg1: i32) -> (i32, i32) {
    %c0_i32 = arith.constant 0 : i32
    %c0_i32_0 = arith.constant 0 : i32
    %c0_i32_1 = arith.constant 0 : i32
    return %c0_i32, %c0_i32_0 : i32, i32
  }
  func.func @transform_10(%arg0: i32, %arg1: i32) -> (i32, i32, i32, i32) {
    %c0_i32 = arith.constant 0 : i32
    %c0_i32_0 = arith.constant 0 : i32
    %c0_i32_1 = arith.constant 0 : i32
    return %arg0, %arg1, %c0_i32, %c0_i32_0 : i32, i32, i32, i32
  }
}

</mosaic_0001>

<llo_original>
// kernel: bottleneck_forward.1
$region0: #{bottleneck_forward.1}
  #allocation0 [shape = 'u32[]', space=smem, size = 0x4, offset = 0x4, fixed_abs, tag = 'smem constant byte address 0x4 - core index']
  #allocation1 [shape = 'u32[144,128]{1,0:T(1,128)}', space=vmem, size = 0x12000, scoped, tag = 'internal scratch']
  #allocation2 [shape = 'bf16[17,24,128]{2,1,0:T(8,128)(2,1)}', space=vmem, size = 0x19800, scoped, tag = 'scratch operand']
  #allocation3 [shape = 'f32[17,24,128]{2,1,0:T(8,128)}', space=vmem, size = 0x33000, scoped, tag = 'scratch operand']
  #allocation4 [shape = 's32[1]{0}', space=sflag, size = 0x4, scoped, tag = 'scratch operand']
  #allocation5 [shape = 's32[]', space=sflag, size = 0x4, offset = 0, fixed_abs, tag = 'sflag constant byte address 0x0 - dummy sync flag']
  %s0 = inlined_call_operand.vmem [shape: bf16[2,18,24,128], index: 0, kind: input, shape index: {}]
  %s1 = inlined_call_operand.vmem [shape: bf16[128,128], index: 1, kind: input, shape index: {}]
  %s2 = inlined_call_operand.vmem [shape: f32[1,128], index: 2, kind: input, shape index: {}]
  %s3 = inlined_call_operand.vmem [shape: f32[1,128], index: 3, kind: input, shape index: {}]
  %s4 = inlined_call_operand.vmem [shape: f32[9,1,128], index: 4, kind: input, shape index: {}]
  %s5 = inlined_call_operand.vmem [shape: f32[1,128], index: 5, kind: input, shape index: {}]
  %s6 = inlined_call_operand.vmem [shape: f32[1,128], index: 6, kind: input, shape index: {}]
  %s7 = inlined_call_operand.vmem [shape: bf16[128,128], index: 7, kind: input, shape index: {}]
  %s8 = inlined_call_operand.vmem [shape: f32[1,128], index: 8, kind: input, shape index: {}]
  %s9 = inlined_call_operand.vmem [shape: f32[1,128], index: 9, kind: input, shape index: {}]
  %s10 = inlined_call_operand.vmem [shape: f32[2,8,8,128], index: 10, kind: output, shape index: {}]
  %s11 = sld [smem:[#allocation0]]
  $region106: #{bottleneck_forward.1} parent=0
    _
  %s13 = ssub.s32 1, %s11
  %s14 = scalar_select 0, %s13, %s11
  loop: start=0, step=1, limit=4
  $region2: #{bottleneck_forward.1} parent=0 // loop_pre_header
    _
  $region3: #{bottleneck_forward.1} parent=0 // loop_header
    %s16 = sphi 0, %s20
    %p17 = scmp.ge.s32.totalorder %s16, 4
    %s23 = sphi 0, %s35
    %s24 = sphi 0, %s31
    %s25 = sphi 0, %s23
    %s26 = sphi 0, %s24
    %s27 = sphi 0, %s25
    %s28 = sphi 0, %s26
    %s36 = sphi 0, %s36
    %s38 = sphi 0, %s36
    %s39 = sphi 0, %s38
    %s53 = sphi 0, %s39
    %s57 = sphi 0, %s57
    %s59 = sphi 0, %s57
    %s60 = sphi 0, %s59
    %s74 = sphi 0, %s60
    %s78 = sphi 0, %s78
    %s80 = sphi 0, %s78
    %s81 = sphi 0, %s80
    %s95 = sphi 0, %s81
    %s99 = sphi 0, %s99
    %s101 = sphi 0, %s99
    %s102 = sphi 0, %s101
    %s116 = sphi 0, %s102
    %s120 = sphi 0, %s120
    %s122 = sphi 0, %s120
    %s123 = sphi 0, %s122
    %s137 = sphi 0, %s123
    %s141 = sphi 0, %s141
    %s143 = sphi 0, %s141
    %s144 = sphi 0, %s143
    %s158 = sphi 0, %s144
    %s162 = sphi 0, %s162
    %s164 = sphi 0, %s162
    %s165 = sphi 0, %s164
    %s179 = sphi 0, %s165
    %s183 = sphi 0, %s183
    %s185 = sphi 0, %s183
    %s186 = sphi 0, %s185
    %s200 = sphi 0, %s186
    %s204 = sphi 0, %s204
    %s206 = sphi 0, %s204
    %s207 = sphi 0, %s206
    %s221 = sphi 0, %s207
    %s229 = sphi 0, %s231
    %s232 = sphi 0, %s229
    %s233 = sphi 0, %s232
    %s249 = sphi 0, %s233
  $region4: #{bottleneck_forward.1} parent=0 // loop_header_branch
    %19 = sbr.rel (%p17) target = $region8
  $region5: #{bottleneck_forward.1} parent=0 // loop_body
    %s21 = ssub.s32 %s16, 1
    %s22 = ssub.s32 %s16, 2
    %s29 = sadd.s32 1, %s24
    %p30 = scmp.ge.s32.totalorder %s29, 1
    %s31 = scalar_select %p30, 0, %s29
    %s32 = sadd.s32 1, %s23
    %s33 = scalar_select %p30, %s32, %s23
    %p34 = scmp.ge.s32.totalorder %s33, 2
    %s35 = scalar_select %p34, 0, %s33
    %s37 = sadd.s32 %s36, 1
    %p40 = scmp.eq.s32.totalorder %s16, 1
    %p41 = scmp.ne.s32.totalorder %s36, %s38
    %p42 = scmp.eq.s32.totalorder %s16, 0
    %p43 = por %p41, %p42
    %p44 = scmp.ne.s32.totalorder %s36, %s38
    %p45 = scmp.eq.s32.totalorder %s21, 1
    %p46 = por %p44, %p45
    %p47 = scmp.ne.s32.totalorder %s38, %s39
    %p48 = scmp.eq.s32.totalorder %s21, 0
    %p49 = por %p47, %p48
    %p50 = scmp.ne.s32.totalorder %s38, %s39
    %p51 = scmp.eq.s32.totalorder %s22, 1
    %p52 = por %p50, %p51
    %p54 = scmp.ne.s32.totalorder %s39, %s53
    %p55 = scmp.eq.s32.totalorder %s22, 0
    %p56 = por %p54, %p55
    %s58 = sadd.s32 %s57, 1
    %p61 = scmp.eq.s32.totalorder %s16, 1
    %p62 = scmp.ne.s32.totalorder %s57, %s59
    %p63 = scmp.eq.s32.totalorder %s16, 0
    %p64 = por %p62, %p63
    %p65 = scmp.ne.s32.totalorder %s57, %s59
    %p66 = scmp.eq.s32.totalorder %s21, 1
    %p67 = por %p65, %p66
    %p68 = scmp.ne.s32.totalorder %s59, %s60
    %p69 = scmp.eq.s32.totalorder %s21, 0
    %p70 = por %p68, %p69
    %p71 = scmp.ne.s32.totalorder %s59, %s60
    %p72 = scmp.eq.s32.totalorder %s22, 1
    %p73 = por %p71, %p72
    %p75 = scmp.ne.s32.totalorder %s60, %s74
    %p76 = scmp.eq.s32.totalorder %s22, 0
    %p77 = por %p75, %p76
    %s79 = sadd.s32 %s78, 1
    %p82 = scmp.eq.s32.totalorder %s16, 1
    %p83 = scmp.ne.s32.totalorder %s78, %s80
    %p84 = scmp.eq.s32.totalorder %s16, 0
    %p85 = por %p83, %p84
    %p86 = scmp.ne.s32.totalorder %s78, %s80
    %p87 = scmp.eq.s32.totalorder %s21, 1
    %p88 = por %p86, %p87
    %p89 = scmp.ne.s32.totalorder %s80, %s81
    %p90 = scmp.eq.s32.totalorder %s21, 0
    %p91 = por %p89, %p90
    %p92 = scmp.ne.s32.totalorder %s80, %s81
    %p93 = scmp.eq.s32.totalorder %s22, 1
    %p94 = por %p92, %p93
    %p96 = scmp.ne.s32.totalorder %s81, %s95
    %p97 = scmp.eq.s32.totalorder %s22, 0
    %p98 = por %p96, %p97
    %s100 = sadd.s32 %s99, 1
    %p103 = scmp.eq.s32.totalorder %s16, 1
    %p104 = scmp.ne.s32.totalorder %s99, %s101
    %p105 = scmp.eq.s32.totalorder %s16, 0
    %p106 = por %p104, %p105
    %p107 = scmp.ne.s32.totalorder %s99, %s101
    %p108 = scmp.eq.s32.totalorder %s21, 1
    %p109 = por %p107, %p108
    %p110 = scmp.ne.s32.totalorder %s101, %s102
    %p111 = scmp.eq.s32.totalorder %s21, 0
    %p112 = por %p110, %p111
    %p113 = scmp.ne.s32.totalorder %s101, %s102
    %p114 = scmp.eq.s32.totalorder %s22, 1
    %p115 = por %p113, %p114
    %p117 = scmp.ne.s32.totalorder %s102, %s116
    %p118 = scmp.eq.s32.totalorder %s22, 0
    %p119 = por %p117, %p118
    %s121 = sadd.s32 %s120, 1
    %p124 = scmp.eq.s32.totalorder %s16, 1
    %p125 = scmp.ne.s32.totalorder %s120, %s122
    %p126 = scmp.eq.s32.totalorder %s16, 0
    %p127 = por %p125, %p126
    %p128 = scmp.ne.s32.totalorder %s120, %s122
    %p129 = scmp.eq.s32.totalorder %s21, 1
    %p130 = por %p128, %p129
    %p131 = scmp.ne.s32.totalorder %s122, %s123
    %p132 = scmp.eq.s32.totalorder %s21, 0
    %p133 = por %p131, %p132
    %p134 = scmp.ne.s32.totalorder %s122, %s123
    %p135 = scmp.eq.s32.totalorder %s22, 1
    %p136 = por %p134, %p135
    %p138 = scmp.ne.s32.totalorder %s123, %s137
    %p139 = scmp.eq.s32.totalorder %s22, 0
    %p140 = por %p138, %p139
    %s142 = sadd.s32 %s141, 1
    %p145 = scmp.eq.s32.totalorder %s16, 1
    %p146 = scmp.ne.s32.totalorder %s141, %s143
    %p147 = scmp.eq.s32.totalorder %s16, 0
    %p148 = por %p146, %p147
    %p149 = scmp.ne.s32.totalorder %s141, %s143
    %p150 = scmp.eq.s32.totalorder %s21, 1
    %p151 = por %p149, %p150
    %p152 = scmp.ne.s32.totalorder %s143, %s144
    %p153 = scmp.eq.s32.totalorder %s21, 0
    %p154 = por %p152, %p153
    %p155 = scmp.ne.s32.totalorder %s143, %s144
    %p156 = scmp.eq.s32.totalorder %s22, 1
    %p157 = por %p155, %p156
    %p159 = scmp.ne.s32.totalorder %s144, %s158
    %p160 = scmp.eq.s32.totalorder %s22, 0
    %p161 = por %p159, %p160
    %s163 = sadd.s32 %s162, 1
    %p166 = scmp.eq.s32.totalorder %s16, 1
    %p167 = scmp.ne.s32.totalorder %s162, %s164
    %p168 = scmp.eq.s32.totalorder %s16, 0
    %p169 = por %p167, %p168
    %p170 = scmp.ne.s32.totalorder %s162, %s164
    %p171 = scmp.eq.s32.totalorder %s21, 1
    %p172 = por %p170, %p171
    %p173 = scmp.ne.s32.totalorder %s164, %s165
    %p174 = scmp.eq.s32.totalorder %s21, 0
    %p175 = por %p173, %p174
    %p176 = scmp.ne.s32.totalorder %s164, %s165
    %p177 = scmp.eq.s32.totalorder %s22, 1
    %p178 = por %p176, %p177
    %p180 = scmp.ne.s32.totalorder %s165, %s179
    %p181 = scmp.eq.s32.totalorder %s22, 0
    %p182 = por %p180, %p181
    %s184 = sadd.s32 %s183, 1
    %p187 = scmp.eq.s32.totalorder %s16, 1
    %p188 = scmp.ne.s32.totalorder %s183, %s185
    %p189 = scmp.eq.s32.totalorder %s16, 0
    %p190 = por %p188, %p189
    %p191 = scmp.ne.s32.totalorder %s183, %s185
    %p192 = scmp.eq.s32.totalorder %s21, 1
    %p193 = por %p191, %p192
    %p194 = scmp.ne.s32.totalorder %s185, %s186
    %p195 = scmp.eq.s32.totalorder %s21, 0
    %p196 = por %p194, %p195
    %p197 = scmp.ne.s32.totalorder %s185, %s186
    %p198 = scmp.eq.s32.totalorder %s22, 1
    %p199 = por %p197, %p198
    %p201 = scmp.ne.s32.totalorder %s186, %s200
    %p202 = scmp.eq.s32.totalorder %s22, 0
    %p203 = por %p201, %p202
    %s205 = sadd.s32 %s204, 1
    %p208 = scmp.eq.s32.totalorder %s16, 1
    %p209 = scmp.ne.s32.totalorder %s204, %s206
    %p210 = scmp.eq.s32.totalorder %s16, 0
    %p211 = por %p209, %p210
    %p212 = scmp.ne.s32.totalorder %s204, %s206
    %p213 = scmp.eq.s32.totalorder %s21, 1
    %p214 = por %p212, %p213
    %p215 = scmp.ne.s32.totalorder %s206, %s207
    %p216 = scmp.eq.s32.totalorder %s21, 0
    %p217 = por %p215, %p216
    %p218 = scmp.ne.s32.totalorder %s206, %s207
    %p219 = scmp.eq.s32.totalorder %s22, 1
    %p220 = por %p218, %p219
    %p222 = scmp.ne.s32.totalorder %s207, %s221
    %p223 = scmp.eq.s32.totalorder %s22, 0
    %p224 = por %p222, %p223
    %s225 = ssub.s32 %s23, %s35
    %s226 = ssub.s32 %s24, %s31
    %s227 = sor.u32 %s225, %s226
    %p228 = scmp.eq.s32.totalorder %s227, 0
    %s230 = sadd.s32 %s229, 1
    %s231 = scalar_select %p228, %s229, %s230
    %p234 = pneg %p228
    %p235 = scmp.eq.s32.totalorder %s16, 1
    %p236 = por %p234, %p235
    %p237 = scmp.ne.s32.totalorder %s229, %s232
    %p238 = scmp.eq.s32.totalorder %s16, 0
    %p239 = por %p237, %p238
    %p240 = scmp.ne.s32.totalorder %s229, %s232
    %p241 = scmp.eq.s32.totalorder %s21, 1
    %p242 = por %p240, %p241
    %p243 = scmp.ne.s32.totalorder %s232, %s233
    %p244 = scmp.eq.s32.totalorder %s21, 0
    %p245 = por %p243, %p244
    %p246 = scmp.ne.s32.totalorder %s232, %s233
    %p247 = scmp.eq.s32.totalorder %s22, 1
    %p248 = por %p246, %p247
    %p250 = scmp.ne.s32.totalorder %s233, %s249
    %p251 = scmp.eq.s32.totalorder %s22, 0
    %p252 = por %p250, %p251
    %p253 = scmp.le.s32.totalorder 1, %s16
    %p254 = scmp.lt.s32.totalorder %s16, 3
    %p255 = pnand %p253, %p254
    %p256 = pneg %p255
    // Predicated region
    $region9: #{bottleneck_forward.1} parent=5 // pred_check
      _
    $region10: #{bottleneck_forward.1} parent=5 // pred_check_branch
      %258 = sbr.rel (%p255) target = $region12
    $region11: #{bottleneck_forward.1} parent=5 // pred_region
      %s259 = ssub.s32 %s16, 1
      // Predicated region
      $region13: #{bottleneck_forward.1} parent=11 // pred_check
        %p260 = pneg %p49
      $region14: #{bottleneck_forward.1} parent=11 // pred_check_branch
        %262 = sbr.rel (%p260) target = $region16
      $region15: #{bottleneck_forward.1} parent=11 // pred_region
        _
      $region16: #{bottleneck_forward.1} parent=11 // pred_fallthru
        _
      // Predicated region
      $region17: #{bottleneck_forward.1} parent=11 // pred_check
        %p263 = pneg %p70
      $region18: #{bottleneck_forward.1} parent=11 // pred_check_branch
        %265 = sbr.rel (%p263) target = $region20
      $region19: #{bottleneck_forward.1} parent=11 // pred_region
        _
      $region20: #{bottleneck_forward.1} parent=11 // pred_fallthru
        _
      // Predicated region
      $region21: #{bottleneck_forward.1} parent=11 // pred_check
        %p266 = pneg %p91
      $region22: #{bottleneck_forward.1} parent=11 // pred_check_branch
        %268 = sbr.rel (%p266) target = $region24
      $region23: #{bottleneck_forward.1} parent=11 // pred_region
        _
      $region24: #{bottleneck_forward.1} parent=11 // pred_fallthru
        _
      // Predicated region
      $region25: #{bottleneck_forward.1} parent=11 // pred_check
        %p269 = pneg %p112
      $region26: #{bottleneck_forward.1} parent=11 // pred_check_branch
        %271 = sbr.rel (%p269) target = $region28
      $region27: #{bottleneck_forward.1} parent=11 // pred_region
        _
      $region28: #{bottleneck_forward.1} parent=11 // pred_fallthru
        _
      // Predicated region
      $region29: #{bottleneck_forward.1} parent=11 // pred_check
        %p272 = pneg %p133
      $region30: #{bottleneck_forward.1} parent=11 // pred_check_branch
        %274 = sbr.rel (%p272) target = $region32
      $region31: #{bottleneck_forward.1} parent=11 // pred_region
        _
      $region32: #{bottleneck_forward.1} parent=11 // pred_fallthru
        _
      // Predicated region
      $region33: #{bottleneck_forward.1} parent=11 // pred_check
        %p275 = pneg %p154
      $region34: #{bottleneck_forward.1} parent=11 // pred_check_branch
        %277 = sbr.rel (%p275) target = $region36
      $region35: #{bottleneck_forward.1} parent=11 // pred_region
        _
      $region36: #{bottleneck_forward.1} parent=11 // pred_fallthru
        _
      // Predicated region
      $region37: #{bottleneck_forward.1} parent=11 // pred_check
        %p278 = pneg %p175
      $region38: #{bottleneck_forward.1} parent=11 // pred_check_branch
        %280 = sbr.rel (%p278) target = $region40
      $region39: #{bottleneck_forward.1} parent=11 // pred_region
        _
      $region40: #{bottleneck_forward.1} parent=11 // pred_fallthru
        _
      // Predicated region
      $region41: #{bottleneck_forward.1} parent=11 // pred_check
        %p281 = pneg %p196
      $region42: #{bottleneck_forward.1} parent=11 // pred_check_branch
        %283 = sbr.rel (%p281) target = $region44
      $region43: #{bottleneck_forward.1} parent=11 // pred_region
        _
      $region44: #{bottleneck_forward.1} parent=11 // pred_fallthru
        _
      // Predicated region
      $region45: #{bottleneck_forward.1} parent=11 // pred_check
        %p284 = pneg %p217
      $region46: #{bottleneck_forward.1} parent=11 // pred_check_branch
        %286 = sbr.rel (%p284) target = $region48
      $region47: #{bottleneck_forward.1} parent=11 // pred_region
        _
      $region48: #{bottleneck_forward.1} parent=11 // pred_fallthru
        _
    $region12: #{bottleneck_forward.1} parent=5 // pred_fallthru
      _
    %p287 = scmp.lt.s32.totalorder %s16, 2
    // Predicated region
    $region49: #{bottleneck_forward.1} parent=5 // pred_check
      %p288 = pneg %p287
    $region50: #{bottleneck_forward.1} parent=5 // pred_check_branch
      %290 = sbr.rel (%p288) target = $region52
    $region51: #{bottleneck_forward.1} parent=5 // pred_region
      _
    $region52: #{bottleneck_forward.1} parent=5 // pred_fallthru
      _
    %p291 = scmp.le.s32.totalorder 1, %s16
    %p292 = scmp.lt.s32.totalorder %s16, 3
    %p293 = pnand %p291, %p292
    %p294 = pneg %p293
    // Predicated region
    $region53: #{bottleneck_forward.1} parent=5 // pred_check
      _
    $region54: #{bottleneck_forward.1} parent=5 // pred_check_branch
      %296 = sbr.rel (%p293) target = $region56
    $region55: #{bottleneck_forward.1} parent=5 // pred_region
      %s297 = ssub.s32 %s16, 1
      %p298 = pneg %p49
      %p299 = pneg %p46
      %p300 = pneg %p70
      %p301 = pneg %p67
      %p302 = pneg %p91
      %p303 = pneg %p88
      %p304 = pneg %p112
      %p305 = pneg %p109
      %p306 = pneg %p133
      %p307 = pneg %p130
      %p308 = pneg %p154
      %p309 = pneg %p151
      %p310 = pneg %p175
      %p311 = pneg %p172
      %p312 = pneg %p196
      %p313 = pneg %p193
      %p314 = pneg %p217
      %p315 = pneg %p214
      %p316 = pneg %p245
      %p317 = pneg %p242
      %s318 = smul.u32 8, %s26
      %p319 = scmp.lt.s32.totalorder %s25, 1
      %s320 = scalar_select %p319, %s25, 1
      %p321 = scmp.lt.s32.totalorder %s318, 7
      %s322 = scalar_select %p321, %s318, 7
      %s323 = smul.addr %s320, 8
      %s324 = sadd.s32 %s322, %s323
      %s325 = smul.addr %s324, 8
      %s326 = scalar_lea.vmem %s10, %s325
      %s327 = smul.u32 8, %s26
      %p328 = scmp.lt.s32.totalorder %s25, 1
      %s329 = scalar_select %p328, %s25, 1
      %p330 = scmp.lt.s32.totalorder %s327, 7
      %s331 = scalar_select %p330, %s327, 7
      %s332 = smul.addr %s329, 8
      %s333 = sadd.s32 %s331, %s332
      %s334 = smul.addr %s333, 8
      %s335 = scalar_lea.vmem %s10, %s334
      %s336 = smul.u32 8, %s26
      %s338 = smul.u32 %s26, 16
      %s339 = smul.u32 %s338, 3
      %s340 = smul.u32 %s25, 54
      %s341 = sadd.s32 %s339, %s340
      %s342 = smul.addr %s341, 4
      %s343 = scalar_lea.vmem %s0, %s342
      %p345 = scmp.lt.u32.totalorder 204, 8
      %p346 = pneg %p345
      // Predicated region
      $region57: #{bottleneck_forward.1} parent=55 // pred_check
        _
      $region58: #{bottleneck_forward.1} parent=55 // pred_check_branch
        %348 = sbr.rel (%p345) target = $region60
      $region59: #{bottleneck_forward.1} parent=55 // pred_region
        %s363 = sand.u32 204, 7
        %p364 = scmp.eq.s32.totalorder %s363, 0
        %p365 = pneg %p364
        // Predicated region
        $region72: #{bottleneck_forward.1} parent=59 // pred_check
          _
        $region73: #{bottleneck_forward.1} parent=59 // pred_check_branch
          %367 = sbr.rel (%p364) target = $region75
        $region74: #{bottleneck_forward.1} parent=59 // pred_region
          %s368 = sand.u32 204, 7
          %s369 = ssub.s32 204, %s368
          %s370 = scalar_lea.vmem %s343, %s369
          %s371 = ssub.s32 204, %s368
          %s372 = scalar_lea.vmem [#allocation2], %s371
          loop: start=0, step=1, limit=1
          $region76: #{bottleneck_forward.1} parent=74 // loop_pre_header
            _
          $region77: #{bottleneck_forward.1} parent=74 // loop_header
            %s374 = sphi 0, %s378
            %p375 = scmp.ge.s32.totalorder %s374, 1
            %s379 = sphi %s343, %s343
            %s380 = sphi [#allocation2], [#allocation2]
          $region78: #{bottleneck_forward.1} parent=74 // loop_header_branch
            %377 = sbr.rel (%p375) target = $region82
          $region79: #{bottleneck_forward.1} parent=74 // loop_body
            %v381 = vld [vmem:[%s379] sm:$0xff]
            %382 = vst [vmem:[%s380] sm:$0xff] %v381
            %v383 = vld [vmem:[%s379 + $0x8] sm:$0xff]
            %384 = vst [vmem:[%s380 + $0x8] sm:$0xff] %v383
            %v385 = vld [vmem:[%s379 + $0x10] sm:$0xff]
            %386 = vst [vmem:[%s380 + $0x10] sm:$0xff] %v385
            %v387 = vld [vmem:[%s379 + $0x18] sm:$0xff]
            %388 = vst [vmem:[%s380 + $0x18] sm:$0xff] %v387
            %v389 = vld [vmem:[%s379 + $0x20] sm:$0xff]
            %390 = vst [vmem:[%s380 + $0x20] sm:$0xff] %v389
            %v391 = vld [vmem:[%s379 + $0x28] sm:$0xff]
            %392 = vst [vmem:[%s380 + $0x28] sm:$0xff] %v391
            %v393 = vld [vmem:[%s379 + $0x30] sm:$0xff]
            %394 = vst [vmem:[%s380 + $0x30] sm:$0xff] %v393
            %v395 = vld [vmem:[%s379 + $0x38] sm:$0xff]
            %396 = vst [vmem:[%s380 + $0x38] sm:$0xff] %v395
            %v397 = vld [vmem:[%s379 + $0x40] sm:$0xff]
            %398 = vst [vmem:[%s380 + $0x40] sm:$0xff] %v397
            %v399 = vld [vmem:[%s379 + $0x48] sm:$0xff]
            %400 = vst [vmem:[%s380 + $0x48] sm:$0xff] %v399
            %v401 = vld [vmem:[%s379 + $0x50] sm:$0xff]
            %402 = vst [vmem:[%s380 + $0x50] sm:$0xff] %v401
            %v403 = vld [vmem:[%s379 + $0x58] sm:$0xff]
            %404 = vst [vmem:[%s380 + $0x58] sm:$0xff] %v403
            %v405 = vld [vmem:[%s379 + $0x60] sm:$0xff]
            %406 = vst [vmem:[%s380 + $0x60] sm:$0xff] %v405
            %v407 = vld [vmem:[%s379 + $0x68] sm:$0xff]
            %408 = vst [vmem:[%s380 + $0x68] sm:$0xff] %v407
            %v409 = vld [vmem:[%s379 + $0x70] sm:$0xff]
            %410 = vst [vmem:[%s380 + $0x70] sm:$0xff] %v409
            %v411 = vld [vmem:[%s379 + $0x78] sm:$0xff]
            %412 = vst [vmem:[%s380 + $0x78] sm:$0xff] %v411
            %v413 = vld [vmem:[%s379 + $0x80] sm:$0xff]
            %414 = vst [vmem:[%s380 + $0x80] sm:$0xff] %v413
            %v415 = vld [vmem:[%s379 + $0x88] sm:$0xff]
            %416 = vst [vmem:[%s380 + $0x88] sm:$0xff] %v415
            %v417 = vld [vmem:[%s379 + $0x90] sm:$0xff]
            %418 = vst [vmem:[%s380 + $0x90] sm:$0xff] %v417
            %v419 = vld [vmem:[%s379 + $0x98] sm:$0xff]
            %420 = vst [vmem:[%s380 + $0x98] sm:$0xff] %v419
            %v421 = vld [vmem:[%s379 + $0xa0] sm:$0xff]
            %422 = vst [vmem:[%s380 + $0xa0] sm:$0xff] %v421
            %v423 = vld [vmem:[%s379 + $0xa8] sm:$0xff]
            %424 = vst [vmem:[%s380 + $0xa8] sm:$0xff] %v423
            %v425 = vld [vmem:[%s379 + $0xb0] sm:$0xff]
            %426 = vst [vmem:[%s380 + $0xb0] sm:$0xff] %v425
            %v427 = vld [vmem:[%s379 + $0xb8] sm:$0xff]
            %428 = vst [vmem:[%s380 + $0xb8] sm:$0xff] %v427
            %v429 = vld [vmem:[%s379 + $0xc0] sm:$0xff]
            %430 = vst [vmem:[%s380 + $0xc0] sm:$0xff] %v429
          $region80: #{bottleneck_forward.1} parent=74 // loop_footer
            %s378 = sadd.s32 1, %s374
          $region81: #{bottleneck_forward.1} parent=74 // loop_footer_branch
            %373 = sbr.rel target = $region77
          $region82: #{bottleneck_forward.1} parent=74 // loop_exit
            _
          %s431 = sshllo.u32 0, %s368
          loop: start=0, step=1, limit=1
          $region83: #{bottleneck_forward.1} parent=74 // loop_pre_header
            _
          $region84: #{bottleneck_forward.1} parent=74 // loop_header
            %s433 = sphi 0, %s437
            %p434 = scmp.ge.s32.totalorder %s433, 1
            %s438 = sphi %s370, %s370
            %s439 = sphi %s372, %s372
          $region85: #{bottleneck_forward.1} parent=74 // loop_header_branch
            %436 = sbr.rel (%p434) target = $region89
          $region86: #{bottleneck_forward.1} parent=74 // loop_body
            %v440 = vld [vmem:[%s438] sm:%s431]
            %441 = vst [vmem:[%s439] sm:%s431] %v440
          $region87: #{bottleneck_forward.1} parent=74 // loop_footer
            %s437 = sadd.s32 1, %s433
          $region88: #{bottleneck_forward.1} parent=74 // loop_footer_branch
            %432 = sbr.rel target = $region84
          $region89: #{bottleneck_forward.1} parent=74 // loop_exit
            _
        $region75: #{bottleneck_forward.1} parent=59 // pred_fallthru
          _
      $region60: #{bottleneck_forward.1} parent=55 // pred_fallthru
        _
      // Predicated region
      $region61: #{bottleneck_forward.1} parent=55 // pred_check
        %p349 = pneg %p345
      $region62: #{bottleneck_forward.1} parent=55 // pred_check_branch
        %351 = sbr.rel (%p349) target = $region64
      $region63: #{bottleneck_forward.1} parent=55 // pred_region
        %s352 = sshllo.u32 0, 204
        loop: start=0, step=1, limit=1
        $region65: #{bottleneck_forward.1} parent=63 // loop_pre_header
          _
        $region66: #{bottleneck_forward.1} parent=63 // loop_header
          %s354 = sphi 0, %s358
          %p355 = scmp.ge.s32.totalorder %s354, 1
          %s359 = sphi %s343, %s343
          %s360 = sphi [#allocation2], [#allocation2]
        $region67: #{bottleneck_forward.1} parent=63 // loop_header_branch
          %357 = sbr.rel (%p355) target = $region71
        $region68: #{bottleneck_forward.1} parent=63 // loop_body
          %v361 = vld [vmem:[%s359] sm:%s352]
          %362 = vst [vmem:[%s360] sm:%s352] %v361
        $region69: #{bottleneck_forward.1} parent=63 // loop_footer
          %s358 = sadd.s32 1, %s354
        $region70: #{bottleneck_forward.1} parent=63 // loop_footer_branch
          %353 = sbr.rel target = $region66
        $region71: #{bottleneck_forward.1} parent=63 // loop_exit
          _
      $region64: #{bottleneck_forward.1} parent=55 // pred_fallthru
        _
      // Predicated region
      $region90: #{bottleneck_forward.1} parent=55 // pred_check
        _
      $region91: #{bottleneck_forward.1} parent=55 // pred_check_branch
        %444 = sbr.rel (0) target = $region93
      $region92: #{bottleneck_forward.1} parent=55 // pred_region
        %445 = vsyncadd [#allocation4], 3264
      $region93: #{bottleneck_forward.1} parent=55 // pred_fallthru
        _
      %s446 = smul.u32 4, 17
      %s447 = smul.u32 %s446, 3
      %s448 = smul.u32 %s447, 1
      %s449 = sshll.u32 %s448, 4
      %450 = dma.done [#allocation4], %s449
      %v451 = vld [vmem:[#allocation2] sm:$0xf]
      %v452 = vld [vmem:[#allocation2 + $0x4] sm:$0xf]
      %v453 = vld [vmem:[#allocation2 + $0x8] sm:$0xf]
      %v454 = vld [vmem:[#allocation2 + $0xc] sm:$0xf]
      %v455 = vld [vmem:[#allocation2 + $0x10] sm:$0xf]
      %v456 = vld [vmem:[#allocation2 + $0x14] sm:$0xf]
      %v457 = vld [vmem:[#allocation2 + $0x18] sm:$0xf]
      %v458 = vld [vmem:[#allocation2 + $0x1c] sm:$0xf]
      %v459 = vld [vmem:[#allocation2 + $0x20] sm:$0xf]
      %v460 = vld [vmem:[#allocation2 + $0x24] sm:$0xf]
      %v461 = vld [vmem:[#allocation2 + $0x28] sm:$0xf]
      %v462 = vld [vmem:[#allocation2 + $0x2c] sm:$0xf]
      %v463 = vld [vmem:[#allocation2 + $0x30] sm:$0xf]
      %v464 = vld [vmem:[#allocation2 + $0x34] sm:$0xf]
      %v465 = vld [vmem:[#allocation2 + $0x38] sm:$0xf]
      %v466 = vld [vmem:[#allocation2 + $0x3c] sm:$0xf]
      %v467 = vld [vmem:[#allocation2 + $0x40] sm:$0xf]
      %v468 = vld [vmem:[#allocation2 + $0x44] sm:$0xf]
      %v469 = vld [vmem:[#allocation2 + $0x48] sm:$0xf]
      %v470 = vld [vmem:[#allocation2 + $0x4c] sm:$0xf]
      %v471 = vld [vmem:[#allocation2 + $0x50] sm:$0xf]
      %v472 = vld [vmem:[#allocation2 + $0x54] sm:$0xf]
      %v473 = vld [vmem:[#allocation2 + $0x58] sm:$0xf]
      %v474 = vld [vmem:[#allocation2 + $0x5c] sm:$0xf]
      %v475 = vld [vmem:[#allocation2 + $0x60] sm:$0xf]
      %v476 = vld [vmem:[#allocation2 + $0x64] sm:$0xf]
      %v477 = vld [vmem:[#allocation2 + $0x68] sm:$0xf]
      %v478 = vld [vmem:[#allocation2 + $0x6c] sm:$0xf]
      %v479 = vld [vmem:[#allocation2 + $0x70] sm:$0xf]
      %v480 = vld [vmem:[#allocation2 + $0x74] sm:$0xf]
      %v481 = vld [vmem:[#allocation2 + $0x78] sm:$0xf]
      %v482 = vld [vmem:[#allocation2 + $0x7c] sm:$0xf]
      %v483 = vld [vmem:[#allocation2 + $0x80] sm:$0xf]
      %v484 = vld [vmem:[#allocation2 + $0x84] sm:$0xf]
      %v485 = vld [vmem:[#allocation2 + $0x88] sm:$0xf]
      %v486 = vld [vmem:[#allocation2 + $0x8c] sm:$0xf]
      %v487 = vld [vmem:[#allocation2 + $0x90] sm:$0xf]
      %v488 = vld [vmem:[#allocation2 + $0x94] sm:$0xf]
      %v489 = vld [vmem:[#allocation2 + $0x98] sm:$0xf]
      %v490 = vld [vmem:[#allocation2 + $0x9c] sm:$0xf]
      %v491 = vld [vmem:[#allocation2 + $0xa0] sm:$0xf]
      %v492 = vld [vmem:[#allocation2 + $0xa4] sm:$0xf]
      %v493 = vld [vmem:[#allocation2 + $0xa8] sm:$0xf]
      %v494 = vld [vmem:[#allocation2 + $0xac] sm:$0xf]
      %v495 = vld [vmem:[#allocation2 + $0xb0] sm:$0xf]
      %v496 = vld [vmem:[#allocation2 + $0xb4] sm:$0xf]
      %v497 = vld [vmem:[#allocation2 + $0xb8] sm:$0xf]
      %v498 = vld [vmem:[#allocation2 + $0xbc] sm:$0xf]
      %v499 = vld [vmem:[#allocation2 + $0xc0] sm:$0xf]
      %v500 = vld [vmem:[#allocation2 + $0xc4] sm:$0xf]
      %v501 = vld [vmem:[#allocation2 + $0xc8] sm:$0xf]
      %v502 = vld [vmem:[%s1] sm:$0xf]
      %v503 = vld [vmem:[%s1 + $0x4] sm:$0xf]
      %v504 = vld [vmem:[%s1 + $0x8] sm:$0xf]
      %v505 = vld [vmem:[%s1 + $0xc] sm:$0xf]
      %v506 = vld [vmem:[%s1 + $0x10] sm:$0xf]
      %v507 = vld [vmem:[%s1 + $0x14] sm:$0xf]
      %v508 = vld [vmem:[%s1 + $0x18] sm:$0xf]
      %v509 = vld [vmem:[%s1 + $0x1c] sm:$0xf]
      %v510 = vld [vmem:[%s1 + $0x20] sm:$0xf]
      %v511 = vld [vmem:[%s1 + $0x24] sm:$0xf]
      %v512 = vld [vmem:[%s1 + $0x28] sm:$0xf]
      %v513 = vld [vmem:[%s1 + $0x2c] sm:$0xf]
      %v514 = vld [vmem:[%s1 + $0x30] sm:$0xf]
      %v515 = vld [vmem:[%s1 + $0x34] sm:$0xf]
      %v516 = vld [vmem:[%s1 + $0x38] sm:$0xf]
      %v517 = vld [vmem:[%s1 + $0x3c] sm:$0xf]
      %v569 = vunpack.c.l.b16 %v451
      %v570 = vunpack.c.l.b16 %v452
      %v571 = vunpack.c.l.b16 %v453
      %v572 = vunpack.c.l.b16 %v454
      %v573 = vunpack.c.l.b16 %v455
      %v574 = vunpack.c.l.b16 %v456
      %v575 = vunpack.c.l.b16 %v457
      %v576 = vunpack.c.l.b16 %v458
      %v577 = vunpack.c.l.b16 %v459
      %v578 = vunpack.c.l.b16 %v460
      %v579 = vunpack.c.l.b16 %v461
      %v580 = vunpack.c.l.b16 %v462
      %v581 = vunpack.c.l.b16 %v463
      %v582 = vunpack.c.l.b16 %v464
      %v583 = vunpack.c.l.b16 %v465
      %v584 = vunpack.c.l.b16 %v466
      %v585 = vunpack.c.l.b16 %v467
      %v586 = vunpack.c.l.b16 %v468
      %v587 = vunpack.c.l.b16 %v469
      %v588 = vunpack.c.l.b16 %v470
      %v589 = vunpack.c.l.b16 %v471
      %v590 = vunpack.c.l.b16 %v472
      %v591 = vunpack.c.l.b16 %v473
      %v592 = vunpack.c.l.b16 %v474
      %v593 = vunpack.c.l.b16 %v475
      %v594 = vunpack.c.l.b16 %v476
      %v595 = vunpack.c.l.b16 %v477
      %v596 = vunpack.c.l.b16 %v478
      %v597 = vunpack.c.l.b16 %v479
      %v598 = vunpack.c.l.b16 %v480
      %v599 = vunpack.c.l.b16 %v481
      %v600 = vunpack.c.l.b16 %v482
      %v601 = vunpack.c.l.b16 %v483
      %v602 = vunpack.c.l.b16 %v484
      %v603 = vunpack.c.l.b16 %v485
      %v604 = vunpack.c.l.b16 %v486
      %v605 = vunpack.c.l.b16 %v487
      %v606 = vunpack.c.l.b16 %v488
      %v607 = vunpack.c.l.b16 %v489
      %v608 = vunpack.c.l.b16 %v490
      %v609 = vunpack.c.l.b16 %v491
      %v610 = vunpack.c.l.b16 %v492
      %v611 = vunpack.c.l.b16 %v493
      %v612 = vunpack.c.l.b16 %v494
      %v613 = vunpack.c.l.b16 %v495
      %v614 = vunpack.c.l.b16 %v496
      %v615 = vunpack.c.l.b16 %v497
      %v616 = vunpack.c.l.b16 %v498
      %v617 = vunpack.c.l.b16 %v499
      %v618 = vunpack.c.l.b16 %v500
      %v619 = vunpack.c.l.b16 %v501
      %v620 = vpack.c.b16 %v570, %v569
      %v621 = vpack.c.b16 %v572, %v571
      %v622 = vpack.c.b16 %v574, %v573
      %v623 = vpack.c.b16 %v576, %v575
      %v624 = vpack.c.b16 %v578, %v577
      %v625 = vpack.c.b16 %v580, %v579
      %v626 = vpack.c.b16 %v582, %v581
      %v627 = vpack.c.b16 %v584, %v583
      %v628 = vpack.c.b16 %v586, %v585
      %v629 = vpack.c.b16 %v588, %v587
      %v630 = vpack.c.b16 %v590, %v589
      %v631 = vpack.c.b16 %v592, %v591
      %v632 = vpack.c.b16 %v594, %v593
      %v633 = vpack.c.b16 %v596, %v595
      %v634 = vpack.c.b16 %v598, %v597
      %v635 = vpack.c.b16 %v600, %v599
      %v636 = vpack.c.b16 %v602, %v601
      %v637 = vpack.c.b16 %v604, %v603
      %v638 = vpack.c.b16 %v606, %v605
      %v639 = vpack.c.b16 %v608, %v607
      %v640 = vpack.c.b16 %v610, %v609
      %v641 = vpack.c.b16 %v612, %v611
      %v642 = vpack.c.b16 %v614, %v613
      %v643 = vpack.c.b16 %v616, %v615
      %v644 = vpack.c.b16 %v618, %v617
      %v645 = vpack.c.b16 %v619, %v619
      %v688 = vunpack.c.l.b16 %v502
      %v689 = vunpack.c.l.b16 %v503
      %v690 = vunpack.c.l.b16 %v504
      %v691 = vunpack.c.l.b16 %v505
      %v692 = vunpack.c.l.b16 %v506
      %v693 = vunpack.c.l.b16 %v507
      %v694 = vunpack.c.l.b16 %v508
      %v695 = vunpack.c.l.b16 %v509
      %v696 = vunpack.c.l.b16 %v510
      %v697 = vunpack.c.l.b16 %v511
      %v698 = vunpack.c.l.b16 %v512
      %v699 = vunpack.c.l.b16 %v513
      %v700 = vunpack.c.l.b16 %v514
      %v701 = vunpack.c.l.b16 %v515
      %v702 = vunpack.c.l.b16 %v516
      %v703 = vunpack.c.l.b16 %v517
      %v704 = vpack.c.b16 %v689, %v688
      %v705 = vpack.c.b16 %v691, %v690
      %v706 = vpack.c.b16 %v693, %v692
      %v707 = vpack.c.b16 %v695, %v694
      %v708 = vpack.c.b16 %v697, %v696
      %v709 = vpack.c.b16 %v699, %v698
      %v710 = vpack.c.b16 %v701, %v700
      %v711 = vpack.c.b16 %v703, %v702
      %720 = vmatprep.subr.bf16.mxu0 0
      %721 = vmatpush1.bf16.msra.mxu0 %v704
      %722 = vmatprep.subr.bf16.mxu0 0
      %723 = vmatpush1.bf16.msra.mxu0 %v705
      %724 = vmatprep.subr.bf16.mxu0 0
      %725 = vmatpush1.bf16.msra.mxu0 %v706
      %726 = vmatprep.subr.bf16.mxu0 0
      %727 = vmatpush1.bf16.msra.mxu0 %v707
      %728 = vmatprep.subr.bf16.mxu0 0
      %729 = vmatpush1.bf16.msra.mxu0 %v708
      %730 = vmatprep.subr.bf16.mxu0 0
      %731 = vmatpush1.bf16.msra.mxu0 %v709
      %732 = vmatprep.subr.bf16.mxu0 0
      %733 = vmatpush1.bf16.msra.mxu0 %v710
      %734 = vmatprep.subr.bf16.mxu0 0
      %735 = vmatpush1.bf16.msra.mxu0 %v711
      %736 = vmatprep.subr.bf16.mxu0 0
      %737 = vmatpush1.bf16.msra.mxu0 0
      %738 = vmatprep.subr.bf16.mxu0 0
      %739 = vmatpush1.bf16.msra.mxu0 0
      %740 = vmatprep.subr.bf16.mxu0 0
      %741 = vmatpush1.bf16.msra.mxu0 0
      %742 = vmatprep.subr.bf16.mxu0 0
      %743 = vmatpush1.bf16.msra.mxu0 0
      %744 = vmatprep.subr.bf16.mxu0 0
      %745 = vmatpush1.bf16.msra.mxu0 0
      %746 = vmatprep.subr.bf16.mxu0 0
      %747 = vmatpush1.bf16.msra.mxu0 0
      %748 = vmatprep.subr.bf16.mxu0 0
      %749 = vmatpush1.bf16.msra.mxu0 0
      %750 = vmatprep.subr.bf16.mxu0 0
      %751 = vmatpush1.bf16.msra.mxu0 0
      %752 = vmatprep.mubr.bf16.mxu0 0
      %753 = vmatmul.mubr.bf16.gmra.mrb[0].mxu0 %v620
      %v754 = vpop.f32.mrb[0].mxu0
      %v755 = vadd.f32 0.0, %v754
      %v756 = vpop.f32.mrb[0].mxu0
      %v757 = vpop.f32.mrb[0].mxu0
      %v758 = vadd.f32 0.0, %v757
      %v759 = vpop.f32.mrb[0].mxu0
      %760 = vmatprep.mubr.bf16.mxu0 0
      %761 = vmatmul.mubr.bf16.gmra.mrb[0].mxu0 %v621
      %v762 = vpop.f32.mrb[0].mxu0
      %v763 = vadd.f32 0.0, %v762
      %v764 = vpop.f32.mrb[0].mxu0
      %v765 = vpop.f32.mrb[0].mxu0
      %v766 = vadd.f32 0.0, %v765
      %v767 = vpop.f32.mrb[0].mxu0
      %768 = vmatprep.mubr.bf16.mxu0 0
      %769 = vmatmul.mubr.bf16.gmra.mrb[0].mxu0 %v622
      %v770 = vpop.f32.mrb[0].mxu0
      %v771 = vadd.f32 0.0, %v770
      %v772 = vpop.f32.mrb[0].mxu0
      %v773 = vpop.f32.mrb[0].mxu0
      %v774 = vadd.f32 0.0, %v773
      %v775 = vpop.f32.mrb[0].mxu0
      %776 = vmatprep.mubr.bf16.mxu0 0
      %777 = vmatmul.mubr.bf16.gmra.mrb[0].mxu0 %v623
      %v778 = vpop.f32.mrb[0].mxu0
      %v779 = vadd.f32 0.0, %v778
      %v780 = vpop.f32.mrb[0].mxu0
      %v781 = vpop.f32.mrb[0].mxu0
      %v782 = vadd.f32 0.0, %v781
      %v783 = vpop.f32.mrb[0].mxu0
      %784 = vmatprep.mubr.bf16.mxu0 0
      %785 = vmatmul.mubr.bf16.gmra.mrb[0].mxu0 %v624
      %v786 = vpop.f32.mrb[0].mxu0
      %v787 = vadd.f32 0.0, %v786
      %v788 = vpop.f32.mrb[0].mxu0
      %v789 = vpop.f32.mrb[0].mxu0
      %v790 = vadd.f32 0.0, %v789
      %v791 = vpop.f32.mrb[0].mxu0
      %792 = vmatprep.mubr.bf16.mxu0 0
      %793 = vmatmul.mubr.bf16.gmra.mrb[0].mxu0 %v625
      %v794 = vpop.f32.mrb[0].mxu0
      %v795 = vadd.f32 0.0, %v794
      %v796 = vpop.f32.mrb[0].mxu0
      %v797 = vpop.f32.mrb[0].mxu0
      %v798 = vadd.f32 0.0, %v797
      %v799 = vpop.f32.mrb[0].mxu0
      %800 = vmatprep.mubr.bf16.mxu0 0
      %801 = vmatmul.mubr.bf16.gmra.mrb[0].mxu0 %v626
      %v802 = vpop.f32.mrb[0].mxu0
      %v803 = vadd.f32 0.0, %v802
      %v804 = vpop.f32.mrb[0].mxu0
      %v805 = vpop.f32.mrb[0].mxu0
      %v806 = vadd.f32 0.0, %v805
      %v807 = vpop.f32.mrb[0].mxu0
      %808 = vmatprep.mubr.bf16.mxu0 0
      %809 = vmatmul.mubr.bf16.gmra.mrb[0].mxu0 %v627
      %v810 = vpop.f32.mrb[0].mxu0
      %v811 = vadd.f32 0.0, %v810
      %v812 = vpop.f32.mrb[0].mxu0
      %v813 = vpop.f32.mrb[0].mxu0
      %v814 = vadd.f32 0.0, %v813
      %v815 = vpop.f32.mrb[0].mxu0
      %816 = vmatprep.mubr.bf16.mxu0 0
      %817 = vmatmul.mubr.bf16.gmra.mrb[0].mxu0 %v628
      %v818 = vpop.f32.mrb[0].mxu0
      %v819 = vadd.f32 0.0, %v818
      %v820 = vpop.f32.mrb[0].mxu0
      %v821 = vpop.f32.mrb[0].mxu0
      %v822 = vadd.f32 0.0, %v821
      %v823 = vpop.f32.mrb[0].mxu0
      %824 = vmatprep.mubr.bf16.mxu0 0
      %825 = vmatmul.mubr.bf16.gmra.mrb[0].mxu0 %v629
      %v826 = vpop.f32.mrb[0].mxu0
      %v827 = vadd.f32 0.0, %v826
      %v828 = vpop.f32.mrb[0].mxu0
      %v829 = vpop.f32.mrb[0].mxu0
      %v830 = vadd.f32 0.0, %v829
      %v831 = vpop.f32.mrb[0].mxu0
      %832 = vmatprep.mubr.bf16.mxu0 0
      %833 = vmatmul.mubr.bf16.gmra.mrb[0].mxu0 %v630
      %v834 = vpop.f32.mrb[0].mxu0
      %v835 = vadd.f32 0.0, %v834
      %v836 = vpop.f32.mrb[0].mxu0
      %v837 = vpop.f32.mrb[0].mxu0
      %v838 = vadd.f32 0.0, %v837
      %v839 = vpop.f32.mrb[0].mxu0
      %840 = vmatprep.mubr.bf16.mxu0 0
      %841 = vmatmul.mubr.bf16.gmra.mrb[0].mxu0 %v631
      %v842 = vpop.f32.mrb[0].mxu0
      %v843 = vadd.f32 0.0, %v842
      %v844 = vpop.f32.mrb[0].mxu0
      %v845 = vpop.f32.mrb[0].mxu0
      %v846 = vadd.f32 0.0, %v845
      %v847 = vpop.f32.mrb[0].mxu0
      %848 = vmatprep.mubr.bf16.mxu0 0
      %849 = vmatmul.mubr.bf16.gmra.mrb[0].mxu0 %v632
      %v850 = vpop.f32.mrb[0].mxu0
      %v851 = vadd.f32 0.0, %v850
      %v852 = vpop.f32.mrb[0].mxu0
      %v853 = vpop.f32.mrb[0].mxu0
      %v854 = vadd.f32 0.0, %v853
      %v855 = vpop.f32.mrb[0].mxu0
      %856 = vmatprep.mubr.bf16.mxu0 0
      %857 = vmatmul.mubr.bf16.gmra.mrb[0].mxu0 %v633
      %v858 = vpop.f32.mrb[0].mxu0
      %v859 = vadd.f32 0.0, %v858
      %v860 = vpop.f32.mrb[0].mxu0
      %v861 = vpop.f32.mrb[0].mxu0
      %v862 = vadd.f32 0.0, %v861
      %v863 = vpop.f32.mrb[0].mxu0
      %864 = vmatprep.mubr.bf16.mxu0 0
      %865 = vmatmul.mubr.bf16.gmra.mrb[0].mxu0 %v634
      %v866 = vpop.f32.mrb[0].mxu0
      %v867 = vadd.f32 0.0, %v866
      %v868 = vpop.f32.mrb[0].mxu0
      %v869 = vpop.f32.mrb[0].mxu0
      %v870 = vadd.f32 0.0, %v869
      %v871 = vpop.f32.mrb[0].mxu0
      %872 = vmatprep.mubr.bf16.mxu0 0
      %873 = vmatmul.mubr.bf16.gmra.mrb[0].mxu0 %v635
      %v874 = vpop.f32.mrb[0].mxu0
      %v875 = vadd.f32 0.0, %v874
      %v876 = vpop.f32.mrb[0].mxu0
      %v877 = vpop.f32.mrb[0].mxu0
      %v878 = vadd.f32 0.0, %v877
      %v879 = vpop.f32.mrb[0].mxu0
      %880 = vmatprep.mubr.bf16.mxu0 0
      %881 = vmatmul.mubr.bf16.gmra.mrb[0].mxu0 %v636
      %v882 = vpop.f32.mrb[0].mxu0
      %v883 = vadd.f32 0.0, %v882
      %v884 = vpop.f32.mrb[0].mxu0
      %v885 = vpop.f32.mrb[0].mxu0
      %v886 = vadd.f32 0.0, %v885
      %v887 = vpop.f32.mrb[0].mxu0
      %888 = vmatprep.mubr.bf16.mxu0 0
      %889 = vmatmul.mubr.bf16.gmra.mrb[0].mxu0 %v637
      %v890 = vpop.f32.mrb[0].mxu0
      %v891 = vadd.f32 0.0, %v890
      %v892 = vpop.f32.mrb[0].mxu0
      %v893 = vpop.f32.mrb[0].mxu0
      %v894 = vadd.f32 0.0, %v893
      %v895 = vpop.f32.mrb[0].mxu0
      %896 = vmatprep.mubr.bf16.mxu0 0
      %897 = vmatmul.mubr.bf16.gmra.mrb[0].mxu0 %v638
      %v898 = vpop.f32.mrb[0].mxu0
      %v899 = vadd.f32 0.0, %v898
      %v900 = vpop.f32.mrb[0].mxu0
      %v901 = vpop.f32.mrb[0].mxu0
      %v902 = vadd.f32 0.0, %v901
      %v903 = vpop.f32.mrb[0].mxu0
      %904 = vmatprep.mubr.bf16.mxu0 0
      %905 = vmatmul.mubr.bf16.gmra.mrb[0].mxu0 %v639
      %v906 = vpop.f32.mrb[0].mxu0
      %v907 = vadd.f32 0.0, %v906
      %v908 = vpop.f32.mrb[0].mxu0
      %v909 = vpop.f32.mrb[0].mxu0
      %v910 = vadd.f32 0.0, %v909
      %v911 = vpop.f32.mrb[0].mxu0
      %912 = vmatprep.mubr.bf16.mxu0 0
      %913 = vmatmul.mubr.bf16.gmra.mrb[0].mxu0 %v640
      %v914 = vpop.f32.mrb[0].mxu0
      %v915 = vadd.f32 0.0, %v914
      %v916 = vpop.f32.mrb[0].mxu0
      %v917 = vpop.f32.mrb[0].mxu0
      %v918 = vadd.f32 0.0, %v917
      %v919 = vpop.f32.mrb[0].mxu0
      %920 = vmatprep.mubr.bf16.mxu0 0
      %921 = vmatmul.mubr.bf16.gmra.mrb[0].mxu0 %v641
      %v922 = vpop.f32.mrb[0].mxu0
      %v923 = vadd.f32 0.0, %v922
      %v924 = vpop.f32.mrb[0].mxu0
      %v925 = vpop.f32.mrb[0].mxu0
      %v926 = vadd.f32 0.0, %v925
      %v927 = vpop.f32.mrb[0].mxu0
      %928 = vmatprep.mubr.bf16.mxu0 0
      %929 = vmatmul.mubr.bf16.gmra.mrb[0].mxu0 %v642
      %v930 = vpop.f32.mrb[0].mxu0
      %v931 = vadd.f32 0.0, %v930
      %v932 = vpop.f32.mrb[0].mxu0
      %v933 = vpop.f32.mrb[0].mxu0
      %v934 = vadd.f32 0.0, %v933
      %v935 = vpop.f32.mrb[0].mxu0
      %936 = vmatprep.mubr.bf16.mxu0 0
      %937 = vmatmul.mubr.bf16.gmra.mrb[0].mxu0 %v643
      %v938 = vpop.f32.mrb[0].mxu0
      %v939 = vadd.f32 0.0, %v938
      %v940 = vpop.f32.mrb[0].mxu0
      %v941 = vpop.f32.mrb[0].mxu0
      %v942 = vadd.f32 0.0, %v941
      %v943 = vpop.f32.mrb[0].mxu0
      %944 = vmatprep.mubr.bf16.mxu0 0
      %945 = vmatmul.mubr.bf16.gmra.mrb[0].mxu0 %v644
      %v946 = vpop.f32.mrb[0].mxu0
      %v947 = vadd.f32 0.0, %v946
      %v948 = vpop.f32.mrb[0].mxu0
      %v949 = vpop.f32.mrb[0].mxu0
      %v950 = vadd.f32 0.0, %v949
      %v951 = vpop.f32.mrb[0].mxu0
      %952 = vmatprep.mubr.bf16.mxu0 0
      %953 = vmatmul.mubr.bf16.gmra.mrb[0].mxu0 %v645
      %v954 = vpop.f32.mrb[0].mxu0
      %v955 = vadd.f32 0.0, %v954
      %v956 = vpop.f32.mrb[0].mxu0
      %v957 = vpop.f32.mrb[0].mxu0
      %v958 = vpop.f32.mrb[0].mxu0
      %959 = vdwg.mxu0
      %v960 = vld [vmem:[%s2] sm:$0x1]
      %v962 = vlaneseq
      %v963 = vshrl.u32 %v962, 7
      %v964 = vsub.s32 0, %v963
      %v965 = vrot.slane %v960, %v964
      %v967 = vmul.f32 %v755, %v965
      %v968 = vmul.f32 %v758, %v965
      %v969 = vmul.f32 %v763, %v965
      %v970 = vmul.f32 %v766, %v965
      %v971 = vmul.f32 %v771, %v965
      %v972 = vmul.f32 %v774, %v965
      %v973 = vmul.f32 %v779, %v965
      %v974 = vmul.f32 %v782, %v965
      %v975 = vmul.f32 %v787, %v965
      %v976 = vmul.f32 %v790, %v965
      %v977 = vmul.f32 %v795, %v965
      %v978 = vmul.f32 %v798, %v965
      %v979 = vmul.f32 %v803, %v965
      %v980 = vmul.f32 %v806, %v965
      %v981 = vmul.f32 %v811, %v965
      %v982 = vmul.f32 %v814, %v965
      %v983 = vmul.f32 %v819, %v965
      %v984 = vmul.f32 %v822, %v965
      %v985 = vmul.f32 %v827, %v965
      %v986 = vmul.f32 %v830, %v965
      %v987 = vmul.f32 %v835, %v965
      %v988 = vmul.f32 %v838, %v965
      %v989 = vmul.f32 %v843, %v965
      %v990 = vmul.f32 %v846, %v965
      %v991 = vmul.f32 %v851, %v965
      %v992 = vmul.f32 %v854, %v965
      %v993 = vmul.f32 %v859, %v965
      %v994 = vmul.f32 %v862, %v965
      %v995 = vmul.f32 %v867, %v965
      %v996 = vmul.f32 %v870, %v965
      %v997 = vmul.f32 %v875, %v965
      %v998 = vmul.f32 %v878, %v965
      %v999 = vmul.f32 %v883, %v965
      %v1000 = vmul.f32 %v886, %v965
      %v1001 = vmul.f32 %v891, %v965
      %v1002 = vmul.f32 %v894, %v965
      %v1003 = vmul.f32 %v899, %v965
      %v1004 = vmul.f32 %v902, %v965
      %v1005 = vmul.f32 %v907, %v965
      %v1006 = vmul.f32 %v910, %v965
      %v1007 = vmul.f32 %v915, %v965
      %v1008 = vmul.f32 %v918, %v965
      %v1009 = vmul.f32 %v923, %v965
      %v1010 = vmul.f32 %v926, %v965
      %v1011 = vmul.f32 %v931, %v965
      %v1012 = vmul.f32 %v934, %v965
      %v1013 = vmul.f32 %v939, %v965
      %v1014 = vmul.f32 %v942, %v965
      %v1015 = vmul.f32 %v947, %v965
      %v1016 = vmul.f32 %v950, %v965
      %v1017 = vmul.f32 %v955, %v965
      %v1018 = vld [vmem:[%s3] sm:$0x1]
      %v1020 = vlaneseq
      %v1021 = vshrl.u32 %v1020, 7
      %v1022 = vsub.s32 0, %v1021
      %v1023 = vrot.slane %v1018, %v1022
      %v1025 = vadd.f32 %v967, %v1023
      %v1026 = vadd.f32 %v968, %v1023
      %v1027 = vadd.f32 %v969, %v1023
      %v1028 = vadd.f32 %v970, %v1023
      %v1029 = vadd.f32 %v971, %v1023
      %v1030 = vadd.f32 %v972, %v1023
      %v1031 = vadd.f32 %v973, %v1023
      %v1032 = vadd.f32 %v974, %v1023
      %v1033 = vadd.f32 %v975, %v1023
      %v1034 = vadd.f32 %v976, %v1023
      %v1035 = vadd.f32 %v977, %v1023
      %v1036 = vadd.f32 %v978, %v1023
      %v1037 = vadd.f32 %v979, %v1023
      %v1038 = vadd.f32 %v980, %v1023
      %v1039 = vadd.f32 %v981, %v1023
      %v1040 = vadd.f32 %v982, %v1023
      %v1041 = vadd.f32 %v983, %v1023
      %v1042 = vadd.f32 %v984, %v1023
      %v1043 = vadd.f32 %v985, %v1023
      %v1044 = vadd.f32 %v986, %v1023
      %v1045 = vadd.f32 %v987, %v1023
      %v1046 = vadd.f32 %v988, %v1023
      %v1047 = vadd.f32 %v989, %v1023
      %v1048 = vadd.f32 %v990, %v1023
      %v1049 = vadd.f32 %v991, %v1023
      %v1050 = vadd.f32 %v992, %v1023
      %v1051 = vadd.f32 %v993, %v1023
      %v1052 = vadd.f32 %v994, %v1023
      %v1053 = vadd.f32 %v995, %v1023
      %v1054 = vadd.f32 %v996, %v1023
      %v1055 = vadd.f32 %v997, %v1023
      %v1056 = vadd.f32 %v998, %v1023
      %v1057 = vadd.f32 %v999, %v1023
      %v1058 = vadd.f32 %v1000, %v1023
      %v1059 = vadd.f32 %v1001, %v1023
      %v1060 = vadd.f32 %v1002, %v1023
      %v1061 = vadd.f32 %v1003, %v1023
      %v1062 = vadd.f32 %v1004, %v1023
      %v1063 = vadd.f32 %v1005, %v1023
      %v1064 = vadd.f32 %v1006, %v1023
      %v1065 = vadd.f32 %v1007, %v1023
      %v1066 = vadd.f32 %v1008, %v1023
      %v1067 = vadd.f32 %v1009, %v1023
      %v1068 = vadd.f32 %v1010, %v1023
      %v1069 = vadd.f32 %v1011, %v1023
      %v1070 = vadd.f32 %v1012, %v1023
      %v1071 = vadd.f32 %v1013, %v1023
      %v1072 = vadd.f32 %v1014, %v1023
      %v1073 = vadd.f32 %v1015, %v1023
      %v1074 = vadd.f32 %v1016, %v1023
      %v1075 = vadd.f32 %v1017, %v1023
      %v1076 = vmax.f32 %v1025, 0.0
      %v1077 = vmax.f32 %v1026, 0.0
      %v1078 = vmax.f32 %v1027, 0.0
      %v1079 = vmax.f32 %v1028, 0.0
      %v1080 = vmax.f32 %v1029, 0.0
      %v1081 = vmax.f32 %v1030, 0.0
      %v1082 = vmax.f32 %v1031, 0.0
      %v1083 = vmax.f32 %v1032, 0.0
      %v1084 = vmax.f32 %v1033, 0.0
      %v1085 = vmax.f32 %v1034, 0.0
      %v1086 = vmax.f32 %v1035, 0.0
      %v1087 = vmax.f32 %v1036, 0.0
      %v1088 = vmax.f32 %v1037, 0.0
      %v1089 = vmax.f32 %v1038, 0.0
      %v1090 = vmax.f32 %v1039, 0.0
      %v1091 = vmax.f32 %v1040, 0.0
      %v1092 = vmax.f32 %v1041, 0.0
      %v1093 = vmax.f32 %v1042, 0.0
      %v1094 = vmax.f32 %v1043, 0.0
      %v1095 = vmax.f32 %v1044, 0.0
      %v1096 = vmax.f32 %v1045, 0.0
      %v1097 = vmax.f32 %v1046, 0.0
      %v1098 = vmax.f32 %v1047, 0.0
      %v1099 = vmax.f32 %v1048, 0.0
      %v1100 = vmax.f32 %v1049, 0.0
      %v1101 = vmax.f32 %v1050, 0.0
      %v1102 = vmax.f32 %v1051, 0.0
      %v1103 = vmax.f32 %v1052, 0.0
      %v1104 = vmax.f32 %v1053, 0.0
      %v1105 = vmax.f32 %v1054, 0.0
      %v1106 = vmax.f32 %v1055, 0.0
      %v1107 = vmax.f32 %v1056, 0.0
      %v1108 = vmax.f32 %v1057, 0.0
      %v1109 = vmax.f32 %v1058, 0.0
      %v1110 = vmax.f32 %v1059, 0.0
      %v1111 = vmax.f32 %v1060, 0.0
      %v1112 = vmax.f32 %v1061, 0.0
      %v1113 = vmax.f32 %v1062, 0.0
      %v1114 = vmax.f32 %v1063, 0.0
      %v1115 = vmax.f32 %v1064, 0.0
      %v1116 = vmax.f32 %v1065, 0.0
      %v1117 = vmax.f32 %v1066, 0.0
      %v1118 = vmax.f32 %v1067, 0.0
      %v1119 = vmax.f32 %v1068, 0.0
      %v1120 = vmax.f32 %v1069, 0.0
      %v1121 = vmax.f32 %v1070, 0.0
      %v1122 = vmax.f32 %v1071, 0.0
      %v1123 = vmax.f32 %v1072, 0.0
      %v1124 = vmax.f32 %v1073, 0.0
      %v1125 = vmax.f32 %v1074, 0.0
      %v1126 = vmax.f32 %v1075, 0.0
      %v1127 = vstv %s338
      %v1128 = vadd.s32 %v1127, 1
      %v1129 = vadd.s32 %v1127, 2
      %v1130 = vadd.s32 %v1127, 3
      %v1131 = vadd.s32 %v1127, 4
      %v1132 = vadd.s32 %v1127, 5
      %v1133 = vadd.s32 %v1127, 6
      %v1134 = vadd.s32 %v1127, 7
      %v1135 = vadd.s32 %v1127, 8
      %v1136 = vadd.s32 %v1127, 9
      %v1137 = vadd.s32 %v1127, 10
      %v1138 = vadd.s32 %v1127, 11
      %v1139 = vadd.s32 %v1127, 12
      %v1140 = vadd.s32 %v1127, 13
      %v1141 = vadd.s32 %v1127, 14
      %v1142 = vadd.s32 %v1127, 15
      %v1143 = vadd.s32 %v1127, 16
      %v1144 = vlaneseq
      %v1145 = vshrl.u32 %v1144, 7
      %v1146 = vadd.s32 %v1145, 8
      %v1147 = vadd.s32 %v1145, 16
      %vm1148 = vcmp.ge.s32.totalorder %v1127, 1
      %vm1149 = vcmp.ge.s32.totalorder %v1128, 1
      %vm1150 = vcmp.ge.s32.totalorder %v1129, 1
      %vm1151 = vcmp.ge.s32.totalorder %v1130, 1
      %vm1152 = vcmp.ge.s32.totalorder %v1131, 1
      %vm1153 = vcmp.ge.s32.totalorder %v1132, 1
      %vm1154 = vcmp.ge.s32.totalorder %v1133, 1
      %vm1155 = vcmp.ge.s32.totalorder %v1134, 1
      %vm1156 = vcmp.ge.s32.totalorder %v1135, 1
      %vm1157 = vcmp.ge.s32.totalorder %v1136, 1
      %vm1158 = vcmp.ge.s32.totalorder %v1137, 1
      %vm1159 = vcmp.ge.s32.totalorder %v1138, 1
      %vm1160 = vcmp.ge.s32.totalorder %v1139, 1
      %vm1161 = vcmp.ge.s32.totalorder %v1140, 1
      %vm1162 = vcmp.ge.s32.totalorder %v1141, 1
      %vm1163 = vcmp.ge.s32.totalorder %v1142, 1
      %vm1164 = vcmp.ge.s32.totalorder %v1143, 1
      %vm1165 = vcmp.lt.s32.totalorder %v1127, 17
      %vm1166 = vcmp.lt.s32.totalorder %v1128, 17
      %vm1167 = vcmp.lt.s32.totalorder %v1129, 17
      %vm1168 = vcmp.lt.s32.totalorder %v1130, 17
      %vm1169 = vcmp.lt.s32.totalorder %v1131, 17
      %vm1170 = vcmp.lt.s32.totalorder %v1132, 17
      %vm1171 = vcmp.lt.s32.totalorder %v1133, 17
      %vm1172 = vcmp.lt.s32.totalorder %v1134, 17
      %vm1173 = vcmp.lt.s32.totalorder %v1135, 17
      %vm1174 = vcmp.lt.s32.totalorder %v1136, 17
      %vm1175 = vcmp.lt.s32.totalorder %v1137, 17
      %vm1176 = vcmp.lt.s32.totalorder %v1138, 17
      %vm1177 = vcmp.lt.s32.totalorder %v1139, 17
      %vm1178 = vcmp.lt.s32.totalorder %v1140, 17
      %vm1179 = vcmp.lt.s32.totalorder %v1141, 17
      %vm1180 = vcmp.lt.s32.totalorder %v1142, 17
      %vm1181 = vcmp.lt.s32.totalorder %v1143, 17
      %vm1182 = vmand %vm1148, %vm1165
      %vm1183 = vmand %vm1149, %vm1166
      %vm1184 = vmand %vm1150, %vm1167
      %vm1185 = vmand %vm1151, %vm1168
      %vm1186 = vmand %vm1152, %vm1169
      %vm1187 = vmand %vm1153, %vm1170
      %vm1188 = vmand %vm1154, %vm1171
      %vm1189 = vmand %vm1155, %vm1172
      %vm1190 = vmand %vm1156, %vm1173
      %vm1191 = vmand %vm1157, %vm1174
      %vm1192 = vmand %vm1158, %vm1175
      %vm1193 = vmand %vm1159, %vm1176
      %vm1194 = vmand %vm1160, %vm1177
      %vm1195 = vmand %vm1161, %vm1178
      %vm1196 = vmand %vm1162, %vm1179
      %vm1197 = vmand %vm1163, %vm1180
      %vm1198 = vmand %vm1164, %vm1181
      %vm1199 = vcmp.ge.s32.totalorder %v1145, 1
      %vm1200 = vcmp.ge.s32.totalorder %v1146, 1
      %vm1201 = vcmp.ge.s32.totalorder %v1147, 1
      %vm1202 = vmand %vm1182, %vm1199
      %vm1203 = vmand %vm1182, %vm1200
      %vm1204 = vmand %vm1182, %vm1201
      %vm1205 = vmand %vm1183, %vm1199
      %vm1206 = vmand %vm1183, %vm1200
      %vm1207 = vmand %vm1183, %vm1201
      %vm1208 = vmand %vm1184, %vm1199
      %vm1209 = vmand %vm1184, %vm1200
      %vm1210 = vmand %vm1184, %vm1201
      %vm1211 = vmand %vm1185, %vm1199
      %vm1212 = vmand %vm1185, %vm1200
      %vm1213 = vmand %vm1185, %vm1201
      %vm1214 = vmand %vm1186, %vm1199
      %vm1215 = vmand %vm1186, %vm1200
      %vm1216 = vmand %vm1186, %vm1201
      %vm1217 = vmand %vm1187, %vm1199
      %vm1218 = vmand %vm1187, %vm1200
      %vm1219 = vmand %vm1187, %vm1201
      %vm1220 = vmand %vm1188, %vm1199
      %vm1221 = vmand %vm1188, %vm1200
      %vm1222 = vmand %vm1188, %vm1201
      %vm1223 = vmand %vm1189, %vm1199
      %vm1224 = vmand %vm1189, %vm1200
      %vm1225 = vmand %vm1189, %vm1201
      %vm1226 = vmand %vm1190, %vm1199
      %vm1227 = vmand %vm1190, %vm1200
      %vm1228 = vmand %vm1190, %vm1201
      %vm1229 = vmand %vm1191, %vm1199
      %vm1230 = vmand %vm1191, %vm1200
      %vm1231 = vmand %vm1191, %vm1201
      %vm1232 = vmand %vm1192, %vm1199
      %vm1233 = vmand %vm1192, %vm1200
      %vm1234 = vmand %vm1192, %vm1201
      %vm1235 = vmand %vm1193, %vm1199
      %vm1236 = vmand %vm1193, %vm1200
      %vm1237 = vmand %vm1193, %vm1201
      %vm1238 = vmand %vm1194, %vm1199
      %vm1239 = vmand %vm1194, %vm1200
      %vm1240 = vmand %vm1194, %vm1201
      %vm1241 = vmand %vm1195, %vm1199
      %vm1242 = vmand %vm1195, %vm1200
      %vm1243 = vmand %vm1195, %vm1201
      %vm1244 = vmand %vm1196, %vm1199
      %vm1245 = vmand %vm1196, %vm1200
      %vm1246 = vmand %vm1196, %vm1201
      %vm1247 = vmand %vm1197, %vm1199
      %vm1248 = vmand %vm1197, %vm1200
      %vm1249 = vmand %vm1197, %vm1201
      %vm1250 = vmand %vm1198, %vm1199
      %vm1251 = vmand %vm1198, %vm1200
      %vm1252 = vmand %vm1198, %vm1201
      %vm1253 = vcmp.lt.s32.totalorder %v1145, 17
      %vm1254 = vcmp.lt.s32.totalorder %v1146, 17
      %vm1255 = vcmp.lt.s32.totalorder %v1147, 17
      %vm1256 = vmand %vm1202, %vm1253
      %vm1257 = vmand %vm1203, %vm1254
      %vm1258 = vmand %vm1204, %vm1255
      %vm1259 = vmand %vm1205, %vm1253
      %vm1260 = vmand %vm1206, %vm1254
      %vm1261 = vmand %vm1207, %vm1255
      %vm1262 = vmand %vm1208, %vm1253
      %vm1263 = vmand %vm1209, %vm1254
      %vm1264 = vmand %vm1210, %vm1255
      %vm1265 = vmand %vm1211, %vm1253
      %vm1266 = vmand %vm1212, %vm1254
      %vm1267 = vmand %vm1213, %vm1255
      %vm1268 = vmand %vm1214, %vm1253
      %vm1269 = vmand %vm1215, %vm1254
      %vm1270 = vmand %vm1216, %vm1255
      %vm1271 = vmand %vm1217, %vm1253
      %vm1272 = vmand %vm1218, %vm1254
      %vm1273 = vmand %vm1219, %vm1255
      %vm1274 = vmand %vm1220, %vm1253
      %vm1275 = vmand %vm1221, %vm1254
      %vm1276 = vmand %vm1222, %vm1255
      %vm1277 = vmand %vm1223, %vm1253
      %vm1278 = vmand %vm1224, %vm1254
      %vm1279 = vmand %vm1225, %vm1255
      %vm1280 = vmand %vm1226, %vm1253
      %vm1281 = vmand %vm1227, %vm1254
      %vm1282 = vmand %vm1228, %vm1255
      %vm1283 = vmand %vm1229, %vm1253
      %vm1284 = vmand %vm1230, %vm1254
      %vm1285 = vmand %vm1231, %vm1255
      %vm1286 = vmand %vm1232, %vm1253
      %vm1287 = vmand %vm1233, %vm1254
      %vm1288 = vmand %vm1234, %vm1255
      %vm1289 = vmand %vm1235, %vm1253
      %vm1290 = vmand %vm1236, %vm1254
      %vm1291 = vmand %vm1237, %vm1255
      %vm1292 = vmand %vm1238, %vm1253
      %vm1293 = vmand %vm1239, %vm1254
      %vm1294 = vmand %vm1240, %vm1255
      %vm1295 = vmand %vm1241, %vm1253
      %vm1296 = vmand %vm1242, %vm1254
      %vm1297 = vmand %vm1243, %vm1255
      %vm1298 = vmand %vm1244, %vm1253
      %vm1299 = vmand %vm1245, %vm1254
      %vm1300 = vmand %vm1246, %vm1255
      %vm1301 = vmand %vm1247, %vm1253
      %vm1302 = vmand %vm1248, %vm1254
      %vm1303 = vmand %vm1249, %vm1255
      %vm1304 = vmand %vm1250, %vm1253
      %vm1305 = vmand %vm1251, %vm1254
      %vm1306 = vmand %vm1252, %vm1255
      %v1307 = vsel %vm1256, 1, 0
      %v1308 = vsel %vm1257, 1, 0
      %v1309 = vsel %vm1258, 1, 0
      %v1310 = vsel %vm1259, 1, 0
      %v1311 = vsel %vm1260, 1, 0
      %v1312 = vsel %vm1261, 1, 0
      %v1313 = vsel %vm1262, 1, 0
      %v1314 = vsel %vm1263, 1, 0
      %v1315 = vsel %vm1264, 1, 0
      %v1316 = vsel %vm1265, 1, 0
      %v1317 = vsel %vm1266, 1, 0
      %v1318 = vsel %vm1267, 1, 0
      %v1319 = vsel %vm1268, 1, 0
      %v1320 = vsel %vm1269, 1, 0
      %v1321 = vsel %vm1270, 1, 0
      %v1322 = vsel %vm1271, 1, 0
      %v1323 = vsel %vm1272, 1, 0
      %v1324 = vsel %vm1273, 1, 0
      %v1325 = vsel %vm1274, 1, 0
      %v1326 = vsel %vm1275, 1, 0
      %v1327 = vsel %vm1276, 1, 0
      %v1328 = vsel %vm1277, 1, 0
      %v1329 = vsel %vm1278, 1, 0
      %v1330 = vsel %vm1279, 1, 0
      %v1331 = vsel %vm1280, 1, 0
      %v1332 = vsel %vm1281, 1, 0
      %v1333 = vsel %vm1282, 1, 0
      %v1334 = vsel %vm1283, 1, 0
      %v1335 = vsel %vm1284, 1, 0
      %v1336 = vsel %vm1285, 1, 0
      %v1337 = vsel %vm1286, 1, 0
      %v1338 = vsel %vm1287, 1, 0
      %v1339 = vsel %vm1288, 1, 0
      %v1340 = vsel %vm1289, 1, 0
      %v1341 = vsel %vm1290, 1, 0
      %v1342 = vsel %vm1291, 1, 0
      %v1343 = vsel %vm1292, 1, 0
      %v1344 = vsel %vm1293, 1, 0
      %v1345 = vsel %vm1294, 1, 0
      %v1346 = vsel %vm1295, 1, 0
      %v1347 = vsel %vm1296, 1, 0
      %v1348 = vsel %vm1297, 1, 0
      %v1349 = vsel %vm1298, 1, 0
      %v1350 = vsel %vm1299, 1, 0
      %v1351 = vsel %vm1300, 1, 0
      %v1352 = vsel %vm1301, 1, 0
      %v1353 = vsel %vm1302, 1, 0
      %v1354 = vsel %vm1303, 1, 0
      %v1355 = vsel %vm1304, 1, 0
      %v1356 = vsel %vm1305, 1, 0
      %v1357 = vsel %vm1306, 1, 0
      %vm1358 = vcmp.eq.s32.totalorder %v1307, 1
      %vm1359 = vcmp.eq.s32.totalorder %v1308, 1
      %vm1360 = vcmp.eq.s32.totalorder %v1309, 1
      %vm1361 = vcmp.eq.s32.totalorder %v1310, 1
      %vm1362 = vcmp.eq.s32.totalorder %v1311, 1
      %vm1363 = vcmp.eq.s32.totalorder %v1312, 1
      %vm1364 = vcmp.eq.s32.totalorder %v1313, 1
      %vm1365 = vcmp.eq.s32.totalorder %v1314, 1
      %vm1366 = vcmp.eq.s32.totalorder %v1315, 1
      %vm1367 = vcmp.eq.s32.totalorder %v1316, 1
      %vm1368 = vcmp.eq.s32.totalorder %v1317, 1
      %vm1369 = vcmp.eq.s32.totalorder %v1318, 1
      %vm1370 = vcmp.eq.s32.totalorder %v1319, 1
      %vm1371 = vcmp.eq.s32.totalorder %v1320, 1
      %vm1372 = vcmp.eq.s32.totalorder %v1321, 1
      %vm1373 = vcmp.eq.s32.totalorder %v1322, 1
      %vm1374 = vcmp.eq.s32.totalorder %v1323, 1
      %vm1375 = vcmp.eq.s32.totalorder %v1324, 1
      %vm1376 = vcmp.eq.s32.totalorder %v1325, 1
      %vm1377 = vcmp.eq.s32.totalorder %v1326, 1
      %vm1378 = vcmp.eq.s32.totalorder %v1327, 1
      %vm1379 = vcmp.eq.s32.totalorder %v1328, 1
      %vm1380 = vcmp.eq.s32.totalorder %v1329, 1
      %vm1381 = vcmp.eq.s32.totalorder %v1330, 1
      %vm1382 = vcmp.eq.s32.totalorder %v1331, 1
      %vm1383 = vcmp.eq.s32.totalorder %v1332, 1
      %vm1384 = vcmp.eq.s32.totalorder %v1333, 1
      %vm1385 = vcmp.eq.s32.totalorder %v1334, 1
      %vm1386 = vcmp.eq.s32.totalorder %v1335, 1
      %vm1387 = vcmp.eq.s32.totalorder %v1336, 1
      %vm1388 = vcmp.eq.s32.totalorder %v1337, 1
      %vm1389 = vcmp.eq.s32.totalorder %v1338, 1
      %vm1390 = vcmp.eq.s32.totalorder %v1339, 1
      %vm1391 = vcmp.eq.s32.totalorder %v1340, 1
      %vm1392 = vcmp.eq.s32.totalorder %v1341, 1
      %vm1393 = vcmp.eq.s32.totalorder %v1342, 1
      %vm1394 = vcmp.eq.s32.totalorder %v1343, 1
      %vm1395 = vcmp.eq.s32.totalorder %v1344, 1
      %vm1396 = vcmp.eq.s32.totalorder %v1345, 1
      %vm1397 = vcmp.eq.s32.totalorder %v1346, 1
      %vm1398 = vcmp.eq.s32.totalorder %v1347, 1
      %vm1399 = vcmp.eq.s32.totalorder %v1348, 1
      %vm1400 = vcmp.eq.s32.totalorder %v1349, 1
      %vm1401 = vcmp.eq.s32.totalorder %v1350, 1
      %vm1402 = vcmp.eq.s32.totalorder %v1351, 1
      %vm1403 = vcmp.eq.s32.totalorder %v1352, 1
      %vm1404 = vcmp.eq.s32.totalorder %v1353, 1
      %vm1405 = vcmp.eq.s32.totalorder %v1354, 1
      %vm1406 = vcmp.eq.s32.totalorder %v1355, 1
      %vm1407 = vcmp.eq.s32.totalorder %v1356, 1
      %vm1408 = vcmp.eq.s32.totalorder %v1357, 1
      %v1409 = vsel %vm1358, %v1076, 0.0
      %v1410 = vsel %vm1359, %v1077, 0.0
      %v1411 = vsel %vm1360, %v1078, 0.0
      %v1412 = vsel %vm1361, %v1079, 0.0
      %v1413 = vsel %vm1362, %v1080, 0.0
      %v1414 = vsel %vm1363, %v1081, 0.0
      %v1415 = vsel %vm1364, %v1082, 0.0
      %v1416 = vsel %vm1365, %v1083, 0.0
      %v1417 = vsel %vm1366, %v1084, 0.0
      %v1418 = vsel %vm1367, %v1085, 0.0
      %v1419 = vsel %vm1368, %v1086, 0.0
      %v1420 = vsel %vm1369, %v1087, 0.0
      %v1421 = vsel %vm1370, %v1088, 0.0
      %v1422 = vsel %vm1371, %v1089, 0.0
      %v1423 = vsel %vm1372, %v1090, 0.0
      %v1424 = vsel %vm1373, %v1091, 0.0
      %v1425 = vsel %vm1374, %v1092, 0.0
      %v1426 = vsel %vm1375, %v1093, 0.0
      %v1427 = vsel %vm1376, %v1094, 0.0
      %v1428 = vsel %vm1377, %v1095, 0.0
      %v1429 = vsel %vm1378, %v1096, 0.0
      %v1430 = vsel %vm1379, %v1097, 0.0
      %v1431 = vsel %vm1380, %v1098, 0.0
      %v1432 = vsel %vm1381, %v1099, 0.0
      %v1433 = vsel %vm1382, %v1100, 0.0
      %v1434 = vsel %vm1383, %v1101, 0.0
      %v1435 = vsel %vm1384, %v1102, 0.0
      %v1436 = vsel %vm1385, %v1103, 0.0
      %v1437 = vsel %vm1386, %v1104, 0.0
      %v1438 = vsel %vm1387, %v1105, 0.0
      %v1439 = vsel %vm1388, %v1106, 0.0
      %v1440 = vsel %vm1389, %v1107, 0.0
      %v1441 = vsel %vm1390, %v1108, 0.0
      %v1442 = vsel %vm1391, %v1109, 0.0
      %v1443 = vsel %vm1392, %v1110, 0.0
      %v1444 = vsel %vm1393, %v1111, 0.0
      %v1445 = vsel %vm1394, %v1112, 0.0
      %v1446 = vsel %vm1395, %v1113, 0.0
      %v1447 = vsel %vm1396, %v1114, 0.0
      %v1448 = vsel %vm1397, %v1115, 0.0
      %v1449 = vsel %vm1398, %v1116, 0.0
      %v1450 = vsel %vm1399, %v1117, 0.0
      %v1451 = vsel %vm1400, %v1118, 0.0
      %v1452 = vsel %vm1401, %v1119, 0.0
      %v1453 = vsel %vm1402, %v1120, 0.0
      %v1454 = vsel %vm1403, %v1121, 0.0
      %v1455 = vsel %vm1404, %v1122, 0.0
      %v1456 = vsel %vm1405, %v1123, 0.0
      %v1457 = vsel %vm1406, %v1124, 0.0
      %v1458 = vsel %vm1407, %v1125, 0.0
      %v1459 = vsel %vm1408, %v1126, 0.0
      %1460 = vst [vmem:[#allocation3] sm:$0xff] %v1409
      %1461 = vst [vmem:[#allocation3 + $0x8] sm:$0xff] %v1410
      %1462 = vst [vmem:[#allocation3 + $0x10] sm:$0xff] %v1411
      %1463 = vst [vmem:[#allocation3 + $0x18] sm:$0xff] %v1412
      %1464 = vst [vmem:[#allocation3 + $0x20] sm:$0xff] %v1413
      %1465 = vst [vmem:[#allocation3 + $0x28] sm:$0xff] %v1414
      %1466 = vst [vmem:[#allocation3 + $0x30] sm:$0xff] %v1415
      %1467 = vst [vmem:[#allocation3 + $0x38] sm:$0xff] %v1416
      %1468 = vst [vmem:[#allocation3 + $0x40] sm:$0xff] %v1417
      %1469 = vst [vmem:[#allocation3 + $0x48] sm:$0xff] %v1418
      %1470 = vst [vmem:[#allocation3 + $0x50] sm:$0xff] %v1419
      %1471 = vst [vmem:[#allocation3 + $0x58] sm:$0xff] %v1420
      %1472 = vst [vmem:[#allocation3 + $0x60] sm:$0xff] %v1421
      %1473 = vst [vmem:[#allocation3 + $0x68] sm:$0xff] %v1422
      %1474 = vst [vmem:[#allocation3 + $0x70] sm:$0xff] %v1423
      %1475 = vst [vmem:[#allocation3 + $0x78] sm:$0xff] %v1424
      %1476 = vst [vmem:[#allocation3 + $0x80] sm:$0xff] %v1425
      %1477 = vst [vmem:[#allocation3 + $0x88] sm:$0xff] %v1426
      %1478 = vst [vmem:[#allocation3 + $0x90] sm:$0xff] %v1427
      %1479 = vst [vmem:[#allocation3 + $0x98] sm:$0xff] %v1428
      %1480 = vst [vmem:[#allocation3 + $0xa0] sm:$0xff] %v1429
      %1481 = vst [vmem:[#allocation3 + $0xa8] sm:$0xff] %v1430
      %1482 = vst [vmem:[#allocation3 + $0xb0] sm:$0xff] %v1431
      %1483 = vst [vmem:[#allocation3 + $0xb8] sm:$0xff] %v1432
      %1484 = vst [vmem:[#allocation3 + $0xc0] sm:$0xff] %v1433
      %1485 = vst [vmem:[#allocation3 + $0xc8] sm:$0xff] %v1434
      %1486 = vst [vmem:[#allocation3 + $0xd0] sm:$0xff] %v1435
      %1487 = vst [vmem:[#allocation3 + $0xd8] sm:$0xff] %v1436
      %1488 = vst [vmem:[#allocation3 + $0xe0] sm:$0xff] %v1437
      %1489 = vst [vmem:[#allocation3 + $0xe8] sm:$0xff] %v1438
      %1490 = vst [vmem:[#allocation3 + $0xf0] sm:$0xff] %v1439
      %1491 = vst [vmem:[#allocation3 + $0xf8] sm:$0xff] %v1440
      %1492 = vst [vmem:[#allocation3 + $0x100] sm:$0xff] %v1441
      %1493 = vst [vmem:[#allocation3 + $0x108] sm:$0xff] %v1442
      %1494 = vst [vmem:[#allocation3 + $0x110] sm:$0xff] %v1443
      %1495 = vst [vmem:[#allocation3 + $0x118] sm:$0xff] %v1444
      %1496 = vst [vmem:[#allocation3 + $0x120] sm:$0xff] %v1445
      %1497 = vst [vmem:[#allocation3 + $0x128] sm:$0xff] %v1446
      %1498 = vst [vmem:[#allocation3 + $0x130] sm:$0xff] %v1447
      %1499 = vst [vmem:[#allocation3 + $0x138] sm:$0xff] %v1448
      %1500 = vst [vmem:[#allocation3 + $0x140] sm:$0xff] %v1449
      %1501 = vst [vmem:[#allocation3 + $0x148] sm:$0xff] %v1450
      %1502 = vst [vmem:[#allocation3 + $0x150] sm:$0xff] %v1451
      %1503 = vst [vmem:[#allocation3 + $0x158] sm:$0xff] %v1452
      %1504 = vst [vmem:[#allocation3 + $0x160] sm:$0xff] %v1453
      %1505 = vst [vmem:[#allocation3 + $0x168] sm:$0xff] %v1454
      %1506 = vst [vmem:[#allocation3 + $0x170] sm:$0xff] %v1455
      %1507 = vst [vmem:[#allocation3 + $0x178] sm:$0xff] %v1456
      %1508 = vst [vmem:[#allocation3 + $0x180] sm:$0xff] %v1457
      %1509 = vst [vmem:[#allocation3 + $0x188] sm:$0xff] %v1458
      %1510 = vst [vmem:[#allocation3 + $0x190] sm:$0xff] %v1459
      %v1511 = vld [vmem:[#allocation3] ss:$2 sm:$0xff]
      %s1512 = scalar_lea.vmem [#allocation3], 48
      %v1513 = vld [vmem:[%s1512] ss:$2 sm:$0xff]
      %s1514 = scalar_lea.vmem [#allocation3], 96
      %v1515 = vld [vmem:[%s1514] ss:$2 sm:$0xff]
      %s1516 = scalar_lea.vmem [#allocation3], 144
      %v1517 = vld [vmem:[%s1516] ss:$2 sm:$0xff]
      %s1518 = scalar_lea.vmem [#allocation3], 192
      %v1519 = vld [vmem:[%s1518] ss:$2 sm:$0xff]
      %s1520 = scalar_lea.vmem [#allocation3], 240
      %v1521 = vld [vmem:[%s1520] ss:$2 sm:$0xff]
      %s1522 = scalar_lea.vmem [#allocation3], 288
      %v1523 = vld [vmem:[%s1522] ss:$2 sm:$0xff]
      %s1524 = scalar_lea.vmem [#allocation3], 336
      %v1525 = vld [vmem:[%s1524] ss:$2 sm:$0xff]
      %v1526 = vld [vmem:[%s4] sm:$0x1]
      %v1528 = vlaneseq
      %v1529 = vshrl.u32 %v1528, 7
      %v1530 = vsub.s32 0, %v1529
      %v1531 = vrot.slane %v1526, %v1530
      %v1533 = vmul.f32 %v1511, %v1531
      %v1534 = vmul.f32 %v1513, %v1531
      %v1535 = vmul.f32 %v1515, %v1531
      %v1536 = vmul.f32 %v1517, %v1531
      %v1537 = vmul.f32 %v1519, %v1531
      %v1538 = vmul.f32 %v1521, %v1531
      %v1539 = vmul.f32 %v1523, %v1531
      %v1540 = vmul.f32 %v1525, %v1531
      %v1541 = vadd.f32 %v1533, 0.0
      %v1542 = vadd.f32 %v1534, 0.0
      %v1543 = vadd.f32 %v1535, 0.0
      %v1544 = vadd.f32 %v1536, 0.0
      %v1545 = vadd.f32 %v1537, 0.0
      %v1546 = vadd.f32 %v1538, 0.0
      %v1547 = vadd.f32 %v1539, 0.0
      %v1548 = vadd.f32 %v1540, 0.0
      %s1549 = scalar_lea.vmem [#allocation3], 1
      %v1550 = vld [vmem:[%s1549] ss:$2 sm:$0xff]
      %s1551 = scalar_lea.vmem [#allocation3], 49
      %v1552 = vld [vmem:[%s1551] ss:$2 sm:$0xff]
      %s1553 = scalar_lea.vmem [#allocation3], 97
      %v1554 = vld [vmem:[%s1553] ss:$2 sm:$0xff]
      %s1555 = scalar_lea.vmem [#allocation3], 145
      %v1556 = vld [vmem:[%s1555] ss:$2 sm:$0xff]
      %s1557 = scalar_lea.vmem [#allocation3], 193
      %v1558 = vld [vmem:[%s1557] ss:$2 sm:$0xff]
      %s1559 = scalar_lea.vmem [#allocation3], 241
      %v1560 = vld [vmem:[%s1559] ss:$2 sm:$0xff]
      %s1561 = scalar_lea.vmem [#allocation3], 289
      %v1562 = vld [vmem:[%s1561] ss:$2 sm:$0xff]
      %s1563 = scalar_lea.vmem [#allocation3], 337
      %v1564 = vld [vmem:[%s1563] ss:$2 sm:$0xff]
      %s1565 = scalar_lea.vmem %s4, 1
      %v1566 = vld [vmem:[%s1565] sm:$0x1]
      %v1568 = vlaneseq
      %v1569 = vshrl.u32 %v1568, 7
      %v1570 = vsub.s32 0, %v1569
      %v1571 = vrot.slane %v1566, %v1570
      %v1573 = vmul.f32 %v1550, %v1571
      %v1574 = vmul.f32 %v1552, %v1571
      %v1575 = vmul.f32 %v1554, %v1571
      %v1576 = vmul.f32 %v1556, %v1571
      %v1577 = vmul.f32 %v1558, %v1571
      %v1578 = vmul.f32 %v1560, %v1571
      %v1579 = vmul.f32 %v1562, %v1571
      %v1580 = vmul.f32 %v1564, %v1571
      %v1581 = vadd.f32 %v1541, %v1573
      %v1582 = vadd.f32 %v1542, %v1574
      %v1583 = vadd.f32 %v1543, %v1575
      %v1584 = vadd.f32 %v1544, %v1576
      %v1585 = vadd.f32 %v1545, %v1577
      %v1586 = vadd.f32 %v1546, %v1578
      %v1587 = vadd.f32 %v1547, %v1579
      %v1588 = vadd.f32 %v1548, %v1580
      %s1589 = scalar_lea.vmem [#allocation3], 2
      %v1590 = vld [vmem:[%s1589] ss:$2 sm:$0xff]
      %s1591 = scalar_lea.vmem [#allocation3], 50
      %v1592 = vld [vmem:[%s1591] ss:$2 sm:$0xff]
      %s1593 = scalar_lea.vmem [#allocation3], 98
      %v1594 = vld [vmem:[%s1593] ss:$2 sm:$0xff]
      %s1595 = scalar_lea.vmem [#allocation3], 146
      %v1596 = vld [vmem:[%s1595] ss:$2 sm:$0xff]
      %s1597 = scalar_lea.vmem [#allocation3], 194
      %v1598 = vld [vmem:[%s1597] ss:$2 sm:$0xff]
      %s1599 = scalar_lea.vmem [#allocation3], 242
      %v1600 = vld [vmem:[%s1599] ss:$2 sm:$0xff]
      %s1601 = scalar_lea.vmem [#allocation3], 290
      %v1602 = vld [vmem:[%s1601] ss:$2 sm:$0xff]
      %s1603 = scalar_lea.vmem [#allocation3], 338
      %v1604 = vld [vmem:[%s1603] ss:$2 sm:$0xff]
      %s1605 = scalar_lea.vmem %s4, 2
      %v1606 = vld [vmem:[%s1605] sm:$0x1]
      %v1608 = vlaneseq
      %v1609 = vshrl.u32 %v1608, 7
      %v1610 = vsub.s32 0, %v1609
      %v1611 = vrot.slane %v1606, %v1610
      %v1613 = vmul.f32 %v1590, %v1611
      %v1614 = vmul.f32 %v1592, %v1611
      %v1615 = vmul.f32 %v1594, %v1611
      %v1616 = vmul.f32 %v1596, %v1611
      %v1617 = vmul.f32 %v1598, %v1611
      %v1618 = vmul.f32 %v1600, %v1611
      %v1619 = vmul.f32 %v1602, %v1611
      %v1620 = vmul.f32 %v1604, %v1611
      %v1621 = vadd.f32 %v1581, %v1613
      %v1622 = vadd.f32 %v1582, %v1614
      %v1623 = vadd.f32 %v1583, %v1615
      %v1624 = vadd.f32 %v1584, %v1616
      %v1625 = vadd.f32 %v1585, %v1617
      %v1626 = vadd.f32 %v1586, %v1618
      %v1627 = vadd.f32 %v1587, %v1619
      %v1628 = vadd.f32 %v1588, %v1620
      %s1629 = scalar_lea.vmem [#allocation3], 24
      %v1630 = vld [vmem:[%s1629] ss:$2 sm:$0xff]
      %s1631 = scalar_lea.vmem %s1629, 48 [#allocation3]
      %v1632 = vld [vmem:[%s1631] ss:$2 sm:$0xff]
      %s1633 = scalar_lea.vmem %s1629, 96 [#allocation3]
      %v1634 = vld [vmem:[%s1633] ss:$2 sm:$0xff]
      %s1635 = scalar_lea.vmem %s1629, 144 [#allocation3]
      %v1636 = vld [vmem:[%s1635] ss:$2 sm:$0xff]
      %s1637 = scalar_lea.vmem %s1629, 192 [#allocation3]
      %v1638 = vld [vmem:[%s1637] ss:$2 sm:$0xff]
      %s1639 = scalar_lea.vmem %s1629, 240 [#allocation3]
      %v1640 = vld [vmem:[%s1639] ss:$2 sm:$0xff]
      %s1641 = scalar_lea.vmem %s1629, 288 [#allocation3]
      %v1642 = vld [vmem:[%s1641] ss:$2 sm:$0xff]
      %s1643 = scalar_lea.vmem %s1629, 336 [#allocation3]
      %v1644 = vld [vmem:[%s1643] ss:$2 sm:$0xff]
      %s1645 = scalar_lea.vmem %s4, 3
      %v1646 = vld [vmem:[%s1645] sm:$0x1]
      %v1648 = vlaneseq
      %v1649 = vshrl.u32 %v1648, 7
      %v1650 = vsub.s32 0, %v1649
      %v1651 = vrot.slane %v1646, %v1650
      %v1653 = vmul.f32 %v1630, %v1651
      %v1654 = vmul.f32 %v1632, %v1651
      %v1655 = vmul.f32 %v1634, %v1651
      %v1656 = vmul.f32 %v1636, %v1651
      %v1657 = vmul.f32 %v1638, %v1651
      %v1658 = vmul.f32 %v1640, %v1651
      %v1659 = vmul.f32 %v1642, %v1651
      %v1660 = vmul.f32 %v1644, %v1651
      %v1661 = vadd.f32 %v1621, %v1653
      %v1662 = vadd.f32 %v1622, %v1654
      %v1663 = vadd.f32 %v1623, %v1655
      %v1664 = vadd.f32 %v1624, %v1656
      %v1665 = vadd.f32 %v1625, %v1657
      %v1666 = vadd.f32 %v1626, %v1658
      %v1667 = vadd.f32 %v1627, %v1659
      %v1668 = vadd.f32 %v1628, %v1660
      %s1669 = scalar_lea.vmem %s1629, 1 [#allocation3]
      %v1670 = vld [vmem:[%s1669] ss:$2 sm:$0xff]
      %s1671 = scalar_lea.vmem %s1629, 49 [#allocation3]
      %v1672 = vld [vmem:[%s1671] ss:$2 sm:$0xff]
      %s1673 = scalar_lea.vmem %s1629, 97 [#allocation3]
      %v1674 = vld [vmem:[%s1673] ss:$2 sm:$0xff]
      %s1675 = scalar_lea.vmem %s1629, 145 [#allocation3]
      %v1676 = vld [vmem:[%s1675] ss:$2 sm:$0xff]
      %s1677 = scalar_lea.vmem %s1629, 193 [#allocation3]
      %v1678 = vld [vmem:[%s1677] ss:$2 sm:$0xff]
      %s1679 = scalar_lea.vmem %s1629, 241 [#allocation3]
      %v1680 = vld [vmem:[%s1679] ss:$2 sm:$0xff]
      %s1681 = scalar_lea.vmem %s1629, 289 [#allocation3]
      %v1682 = vld [vmem:[%s1681] ss:$2 sm:$0xff]
      %s1683 = scalar_lea.vmem %s1629, 337 [#allocation3]
      %v1684 = vld [vmem:[%s1683] ss:$2 sm:$0xff]
      %s1685 = scalar_lea.vmem %s4, 4
      %v1686 = vld [vmem:[%s1685] sm:$0x1]
      %v1688 = vlaneseq
      %v1689 = vshrl.u32 %v1688, 7
      %v1690 = vsub.s32 0, %v1689
      %v1691 = vrot.slane %v1686, %v1690
      %v1693 = vmul.f32 %v1670, %v1691
      %v1694 = vmul.f32 %v1672, %v1691
      %v1695 = vmul.f32 %v1674, %v1691
      %v1696 = vmul.f32 %v1676, %v1691
      %v1697 = vmul.f32 %v1678, %v1691
      %v1698 = vmul.f32 %v1680, %v1691
      %v1699 = vmul.f32 %v1682, %v1691
      %v1700 = vmul.f32 %v1684, %v1691
      %v1701 = vadd.f32 %v1661, %v1693
      %v1702 = vadd.f32 %v1662, %v1694
      %v1703 = vadd.f32 %v1663, %v1695
      %v1704 = vadd.f32 %v1664, %v1696
      %v1705 = vadd.f32 %v1665, %v1697
      %v1706 = vadd.f32 %v1666, %v1698
      %v1707 = vadd.f32 %v1667, %v1699
      %v1708 = vadd.f32 %v1668, %v1700
      %s1709 = scalar_lea.vmem %s1629, 2 [#allocation3]
      %v1710 = vld [vmem:[%s1709] ss:$2 sm:$0xff]
      %s1711 = scalar_lea.vmem %s1629, 50 [#allocation3]
      %v1712 = vld [vmem:[%s1711] ss:$2 sm:$0xff]
      %s1713 = scalar_lea.vmem %s1629, 98 [#allocation3]
      %v1714 = vld [vmem:[%s1713] ss:$2 sm:$0xff]
      %s1715 = scalar_lea.vmem %s1629, 146 [#allocation3]
      %v1716 = vld [vmem:[%s1715] ss:$2 sm:$0xff]
      %s1717 = scalar_lea.vmem %s1629, 194 [#allocation3]
      %v1718 = vld [vmem:[%s1717] ss:$2 sm:$0xff]
      %s1719 = scalar_lea.vmem %s1629, 242 [#allocation3]
      %v1720 = vld [vmem:[%s1719] ss:$2 sm:$0xff]
      %s1721 = scalar_lea.vmem %s1629, 290 [#allocation3]
      %v1722 = vld [vmem:[%s1721] ss:$2 sm:$0xff]
      %s1723 = scalar_lea.vmem %s1629, 338 [#allocation3]
      %v1724 = vld [vmem:[%s1723] ss:$2 sm:$0xff]
      %s1725 = scalar_lea.vmem %s4, 5
      %v1726 = vld [vmem:[%s1725] sm:$0x1]
      %v1728 = vlaneseq
      %v1729 = vshrl.u32 %v1728, 7
      %v1730 = vsub.s32 0, %v1729
      %v1731 = vrot.slane %v1726, %v1730
      %v1733 = vmul.f32 %v1710, %v1731
      %v1734 = vmul.f32 %v1712, %v1731
      %v1735 = vmul.f32 %v1714, %v1731
      %v1736 = vmul.f32 %v1716, %v1731
      %v1737 = vmul.f32 %v1718, %v1731
      %v1738 = vmul.f32 %v1720, %v1731
      %v1739 = vmul.f32 %v1722, %v1731
      %v1740 = vmul.f32 %v1724, %v1731
      %v1741 = vadd.f32 %v1701, %v1733
      %v1742 = vadd.f32 %v1702, %v1734
      %v1743 = vadd.f32 %v1703, %v1735
      %v1744 = vadd.f32 %v1704, %v1736
      %v1745 = vadd.f32 %v1705, %v1737
      %v1746 = vadd.f32 %v1706, %v1738
      %v1747 = vadd.f32 %v1707, %v1739
      %v1748 = vadd.f32 %v1708, %v1740
      %s1749 = scalar_lea.vmem [#allocation3], 48
      %v1750 = vld [vmem:[%s1749] ss:$2 sm:$0xff]
      %s1751 = scalar_lea.vmem %s1749, 48 [#allocation3]
      %v1752 = vld [vmem:[%s1751] ss:$2 sm:$0xff]
      %s1753 = scalar_lea.vmem %s1749, 96 [#allocation3]
      %v1754 = vld [vmem:[%s1753] ss:$2 sm:$0xff]
      %s1755 = scalar_lea.vmem %s1749, 144 [#allocation3]
      %v1756 = vld [vmem:[%s1755] ss:$2 sm:$0xff]
      %s1757 = scalar_lea.vmem %s1749, 192 [#allocation3]
      %v1758 = vld [vmem:[%s1757] ss:$2 sm:$0xff]
      %s1759 = scalar_lea.vmem %s1749, 240 [#allocation3]
      %v1760 = vld [vmem:[%s1759] ss:$2 sm:$0xff]
      %s1761 = scalar_lea.vmem %s1749, 288 [#allocation3]
      %v1762 = vld [vmem:[%s1761] ss:$2 sm:$0xff]
      %s1763 = scalar_lea.vmem %s1749, 336 [#allocation3]
      %v1764 = vld [vmem:[%s1763] ss:$2 sm:$0xff]
      %s1765 = scalar_lea.vmem %s4, 6
      %v1766 = vld [vmem:[%s1765] sm:$0x1]
      %v1768 = vlaneseq
      %v1769 = vshrl.u32 %v1768, 7
      %v1770 = vsub.s32 0, %v1769
      %v1771 = vrot.slane %v1766, %v1770
      %v1773 = vmul.f32 %v1750, %v1771
      %v1774 = vmul.f32 %v1752, %v1771
      %v1775 = vmul.f32 %v1754, %v1771
      %v1776 = vmul.f32 %v1756, %v1771
      %v1777 = vmul.f32 %v1758, %v1771
      %v1778 = vmul.f32 %v1760, %v1771
      %v1779 = vmul.f32 %v1762, %v1771
      %v1780 = vmul.f32 %v1764, %v1771
      %v1781 = vadd.f32 %v1741, %v1773
      %v1782 = vadd.f32 %v1742, %v1774
      %v1783 = vadd.f32 %v1743, %v1775
      %v1784 = vadd.f32 %v1744, %v1776
      %v1785 = vadd.f32 %v1745, %v1777
      %v1786 = vadd.f32 %v1746, %v1778
      %v1787 = vadd.f32 %v1747, %v1779
      %v1788 = vadd.f32 %v1748, %v1780
      %s1789 = scalar_lea.vmem %s1749, 1 [#allocation3]
      %v1790 = vld [vmem:[%s1789] ss:$2 sm:$0xff]
      %s1791 = scalar_lea.vmem %s1749, 49 [#allocation3]
      %v1792 = vld [vmem:[%s1791] ss:$2 sm:$0xff]
      %s1793 = scalar_lea.vmem %s1749, 97 [#allocation3]
      %v1794 = vld [vmem:[%s1793] ss:$2 sm:$0xff]
      %s1795 = scalar_lea.vmem %s1749, 145 [#allocation3]
      %v1796 = vld [vmem:[%s1795] ss:$2 sm:$0xff]
      %s1797 = scalar_lea.vmem %s1749, 193 [#allocation3]
      %v1798 = vld [vmem:[%s1797] ss:$2 sm:$0xff]
      %s1799 = scalar_lea.vmem %s1749, 241 [#allocation3]
      %v1800 = vld [vmem:[%s1799] ss:$2 sm:$0xff]
      %s1801 = scalar_lea.vmem %s1749, 289 [#allocation3]
      %v1802 = vld [vmem:[%s1801] ss:$2 sm:$0xff]
      %s1803 = scalar_lea.vmem %s1749, 337 [#allocation3]
      %v1804 = vld [vmem:[%s1803] ss:$2 sm:$0xff]
      %s1805 = scalar_lea.vmem %s4, 7
      %v1806 = vld [vmem:[%s1805] sm:$0x1]
      %v1808 = vlaneseq
      %v1809 = vshrl.u32 %v1808, 7
      %v1810 = vsub.s32 0, %v1809
      %v1811 = vrot.slane %v1806, %v1810
      %v1813 = vmul.f32 %v1790, %v1811
      %v1814 = vmul.f32 %v1792, %v1811
      %v1815 = vmul.f32 %v1794, %v1811
      %v1816 = vmul.f32 %v1796, %v1811
      %v1817 = vmul.f32 %v1798, %v1811
      %v1818 = vmul.f32 %v1800, %v1811
      %v1819 = vmul.f32 %v1802, %v1811
      %v1820 = vmul.f32 %v1804, %v1811
      %v1821 = vadd.f32 %v1781, %v1813
      %v1822 = vadd.f32 %v1782, %v1814
      %v1823 = vadd.f32 %v1783, %v1815
      %v1824 = vadd.f32 %v1784, %v1816
      %v1825 = vadd.f32 %v1785, %v1817
      %v1826 = vadd.f32 %v1786, %v1818
      %v1827 = vadd.f32 %v1787, %v1819
      %v1828 = vadd.f32 %v1788, %v1820
      %s1829 = scalar_lea.vmem %s1749, 2 [#allocation3]
      %v1830 = vld [vmem:[%s1829] ss:$2 sm:$0xff]
      %s1831 = scalar_lea.vmem %s1749, 50 [#allocation3]
      %v1832 = vld [vmem:[%s1831] ss:$2 sm:$0xff]
      %s1833 = scalar_lea.vmem %s1749, 98 [#allocation3]
      %v1834 = vld [vmem:[%s1833] ss:$2 sm:$0xff]
      %s1835 = scalar_lea.vmem %s1749, 146 [#allocation3]
      %v1836 = vld [vmem:[%s1835] ss:$2 sm:$0xff]
      %s1837 = scalar_lea.vmem %s1749, 194 [#allocation3]
      %v1838 = vld [vmem:[%s1837] ss:$2 sm:$0xff]
      %s1839 = scalar_lea.vmem %s1749, 242 [#allocation3]
      %v1840 = vld [vmem:[%s1839] ss:$2 sm:$0xff]
      %s1841 = scalar_lea.vmem %s1749, 290 [#allocation3]
      %v1842 = vld [vmem:[%s1841] ss:$2 sm:$0xff]
      %s1843 = scalar_lea.vmem %s1749, 338 [#allocation3]
      %v1844 = vld [vmem:[%s1843] ss:$2 sm:$0xff]
      %s1845 = scalar_lea.vmem %s4, 8
      %v1846 = vld [vmem:[%s1845] sm:$0x1]
      %v1848 = vlaneseq
      %v1849 = vshrl.u32 %v1848, 7
      %v1850 = vsub.s32 0, %v1849
      %v1851 = vrot.slane %v1846, %v1850
      %v1853 = vmul.f32 %v1830, %v1851
      %v1854 = vmul.f32 %v1832, %v1851
      %v1855 = vmul.f32 %v1834, %v1851
      %v1856 = vmul.f32 %v1836, %v1851
      %v1857 = vmul.f32 %v1838, %v1851
      %v1858 = vmul.f32 %v1840, %v1851
      %v1859 = vmul.f32 %v1842, %v1851
      %v1860 = vmul.f32 %v1844, %v1851
      %v1861 = vadd.f32 %v1821, %v1853
      %v1862 = vadd.f32 %v1822, %v1854
      %v1863 = vadd.f32 %v1823, %v1855
      %v1864 = vadd.f32 %v1824, %v1856
      %v1865 = vadd.f32 %v1825, %v1857
      %v1866 = vadd.f32 %v1826, %v1858
      %v1867 = vadd.f32 %v1827, %v1859
      %v1868 = vadd.f32 %v1828, %v1860
      %v1869 = vld [vmem:[%s5] sm:$0x1]
      %v1871 = vlaneseq
      %v1872 = vshrl.u32 %v1871, 7
      %v1873 = vsub.s32 0, %v1872
      %v1874 = vrot.slane %v1869, %v1873
      %v1876 = vmul.f32 %v1861, %v1874
      %v1877 = vmul.f32 %v1862, %v1874
      %v1878 = vmul.f32 %v1863, %v1874
      %v1879 = vmul.f32 %v1864, %v1874
      %v1880 = vmul.f32 %v1865, %v1874
      %v1881 = vmul.f32 %v1866, %v1874
      %v1882 = vmul.f32 %v1867, %v1874
      %v1883 = vmul.f32 %v1868, %v1874
      %v1884 = vld [vmem:[%s6] sm:$0x1]
      %v1886 = vlaneseq
      %v1887 = vshrl.u32 %v1886, 7
      %v1888 = vsub.s32 0, %v1887
      %v1889 = vrot.slane %v1884, %v1888
      %v1891 = vadd.f32 %v1876, %v1889
      %v1892 = vadd.f32 %v1877, %v1889
      %v1893 = vadd.f32 %v1878, %v1889
      %v1894 = vadd.f32 %v1879, %v1889
      %v1895 = vadd.f32 %v1880, %v1889
      %v1896 = vadd.f32 %v1881, %v1889
      %v1897 = vadd.f32 %v1882, %v1889
      %v1898 = vadd.f32 %v1883, %v1889
      %v1899 = vmax.f32 %v1891, 0.0
      %v1900 = vmax.f32 %v1892, 0.0
      %v1901 = vmax.f32 %v1893, 0.0
      %v1902 = vmax.f32 %v1894, 0.0
      %v1903 = vmax.f32 %v1895, 0.0
      %v1904 = vmax.f32 %v1896, 0.0
      %v1905 = vmax.f32 %v1897, 0.0
      %v1906 = vmax.f32 %v1898, 0.0
      %v1907 = vpack.c.bf16 %v1900, %v1899
      %v1908 = vpack.c.bf16 %v1902, %v1901
      %v1909 = vpack.c.bf16 %v1904, %v1903
      %v1910 = vpack.c.bf16 %v1906, %v1905
      %v1911 = vld [vmem:[%s7] sm:$0xf]
      %v1912 = vld [vmem:[%s7 + $0x4] sm:$0xf]
      %v1913 = vld [vmem:[%s7 + $0x8] sm:$0xf]
      %v1914 = vld [vmem:[%s7 + $0xc] sm:$0xf]
      %v1915 = vld [vmem:[%s7 + $0x10] sm:$0xf]
      %v1916 = vld [vmem:[%s7 + $0x14] sm:$0xf]
      %v1917 = vld [vmem:[%s7 + $0x18] sm:$0xf]
      %v1918 = vld [vmem:[%s7 + $0x1c] sm:$0xf]
      %v1919 = vld [vmem:[%s7 + $0x20] sm:$0xf]
      %v1920 = vld [vmem:[%s7 + $0x24] sm:$0xf]
      %v1921 = vld [vmem:[%s7 + $0x28] sm:$0xf]
      %v1922 = vld [vmem:[%s7 + $0x2c] sm:$0xf]
      %v1923 = vld [vmem:[%s7 + $0x30] sm:$0xf]
      %v1924 = vld [vmem:[%s7 + $0x34] sm:$0xf]
      %v1925 = vld [vmem:[%s7 + $0x38] sm:$0xf]
      %v1926 = vld [vmem:[%s7 + $0x3c] sm:$0xf]
      %v1943 = vunpack.c.l.b16 %v1911
      %v1944 = vunpack.c.l.b16 %v1912
      %v1945 = vunpack.c.l.b16 %v1913
      %v1946 = vunpack.c.l.b16 %v1914
      %v1947 = vunpack.c.l.b16 %v1915
      %v1948 = vunpack.c.l.b16 %v1916
      %v1949 = vunpack.c.l.b16 %v1917
      %v1950 = vunpack.c.l.b16 %v1918
      %v1951 = vunpack.c.l.b16 %v1919
      %v1952 = vunpack.c.l.b16 %v1920
      %v1953 = vunpack.c.l.b16 %v1921
      %v1954 = vunpack.c.l.b16 %v1922
      %v1955 = vunpack.c.l.b16 %v1923
      %v1956 = vunpack.c.l.b16 %v1924
      %v1957 = vunpack.c.l.b16 %v1925
      %v1958 = vunpack.c.l.b16 %v1926
      %v1959 = vpack.c.b16 %v1944, %v1943
      %v1960 = vpack.c.b16 %v1946, %v1945
      %v1961 = vpack.c.b16 %v1948, %v1947
      %v1962 = vpack.c.b16 %v1950, %v1949
      %v1963 = vpack.c.b16 %v1952, %v1951
      %v1964 = vpack.c.b16 %v1954, %v1953
      %v1965 = vpack.c.b16 %v1956, %v1955
      %v1966 = vpack.c.b16 %v1958, %v1957
      %1975 = vmatprep.subr.bf16.mxu0 0
      %1976 = vmatpush1.bf16.msra.mxu0 %v1959
      %1977 = vmatprep.subr.bf16.mxu0 0
      %1978 = vmatpush1.bf16.msra.mxu0 %v1960
      %1979 = vmatprep.subr.bf16.mxu0 0
      %1980 = vmatpush1.bf16.msra.mxu0 %v1961
      %1981 = vmatprep.subr.bf16.mxu0 0
      %1982 = vmatpush1.bf16.msra.mxu0 %v1962
      %1983 = vmatprep.subr.bf16.mxu0 0
      %1984 = vmatpush1.bf16.msra.mxu0 %v1963
      %1985 = vmatprep.subr.bf16.mxu0 0
      %1986 = vmatpush1.bf16.msra.mxu0 %v1964
      %1987 = vmatprep.subr.bf16.mxu0 0
      %1988 = vmatpush1.bf16.msra.mxu0 %v1965
      %1989 = vmatprep.subr.bf16.mxu0 0
      %1990 = vmatpush1.bf16.msra.mxu0 %v1966
      %1991 = vmatprep.subr.bf16.mxu0 0
      %1992 = vmatpush1.bf16.msra.mxu0 0
      %1993 = vmatprep.subr.bf16.mxu0 0
      %1994 = vmatpush1.bf16.msra.mxu0 0
      %1995 = vmatprep.subr.bf16.mxu0 0
      %1996 = vmatpush1.bf16.msra.mxu0 0
      %1997 = vmatprep.subr.bf16.mxu0 0
      %1998 = vmatpush1.bf16.msra.mxu0 0
      %1999 = vmatprep.subr.bf16.mxu0 0
      %2000 = vmatpush1.bf16.msra.mxu0 0
      %2001 = vmatprep.subr.bf16.mxu0 0
      %2002 = vmatpush1.bf16.msra.mxu0 0
      %2003 = vmatprep.subr.bf16.mxu0 0
      %2004 = vmatpush1.bf16.msra.mxu0 0
      %2005 = vmatprep.subr.bf16.mxu0 0
      %2006 = vmatpush1.bf16.msra.mxu0 0
      %2007 = vmatprep.mubr.bf16.mxu0 0
      %2008 = vmatmul.mubr.bf16.gmra.mrb[0].mxu0 %v1907
      %v2009 = vpop.f32.mrb[0].mxu0
      %v2010 = vadd.f32 0.0, %v2009
      %v2011 = vpop.f32.mrb[0].mxu0
      %v2012 = vpop.f32.mrb[0].mxu0
      %v2013 = vadd.f32 0.0, %v2012
      %v2014 = vpop.f32.mrb[0].mxu0
      %2015 = vmatprep.mubr.bf16.mxu0 0
      %2016 = vmatmul.mubr.bf16.gmra.mrb[0].mxu0 %v1908
      %v2017 = vpop.f32.mrb[0].mxu0
      %v2018 = vadd.f32 0.0, %v2017
      %v2019 = vpop.f32.mrb[0].mxu0
      %v2020 = vpop.f32.mrb[0].mxu0
      %v2021 = vadd.f32 0.0, %v2020
      %v2022 = vpop.f32.mrb[0].mxu0
      %2023 = vmatprep.mubr.bf16.mxu0 0
      %2024 = vmatmul.mubr.bf16.gmra.mrb[0].mxu0 %v1909
      %v2025 = vpop.f32.mrb[0].mxu0
      %v2026 = vadd.f32 0.0, %v2025
      %v2027 = vpop.f32.mrb[0].mxu0
      %v2028 = vpop.f32.mrb[0].mxu0
      %v2029 = vadd.f32 0.0, %v2028
      %v2030 = vpop.f32.mrb[0].mxu0
      %2031 = vmatprep.mubr.bf16.mxu0 0
      %2032 = vmatmul.mubr.bf16.gmra.mrb[0].mxu0 %v1910
      %v2033 = vpop.f32.mrb[0].mxu0
      %v2034 = vadd.f32 0.0, %v2033
      %v2035 = vpop.f32.mrb[0].mxu0
      %v2036 = vpop.f32.mrb[0].mxu0
      %v2037 = vadd.f32 0.0, %v2036
      %v2038 = vpop.f32.mrb[0].mxu0
      %2039 = vdwg.mxu0
      %v2040 = vld [vmem:[%s8] sm:$0x1]
      %v2042 = vlaneseq
      %v2043 = vshrl.u32 %v2042, 7
      %v2044 = vsub.s32 0, %v2043
      %v2045 = vrot.slane %v2040, %v2044
      %v2047 = vmul.f32 %v2010, %v2045
      %v2048 = vmul.f32 %v2013, %v2045
      %v2049 = vmul.f32 %v2018, %v2045
      %v2050 = vmul.f32 %v2021, %v2045
      %v2051 = vmul.f32 %v2026, %v2045
      %v2052 = vmul.f32 %v2029, %v2045
      %v2053 = vmul.f32 %v2034, %v2045
      %v2054 = vmul.f32 %v2037, %v2045
      %v2055 = vld [vmem:[%s9] sm:$0x1]
      %v2057 = vlaneseq
      %v2058 = vshrl.u32 %v2057, 7
      %v2059 = vsub.s32 0, %v2058
      %v2060 = vrot.slane %v2055, %v2059
      %v2062 = vadd.f32 %v2047, %v2060
      %v2063 = vadd.f32 %v2048, %v2060
      %v2064 = vadd.f32 %v2049, %v2060
      %v2065 = vadd.f32 %v2050, %v2060
      %v2066 = vadd.f32 %v2051, %v2060
      %v2067 = vadd.f32 %v2052, %v2060
      %v2068 = vadd.f32 %v2053, %v2060
      %v2069 = vadd.f32 %v2054, %v2060
      %v2070 = vmax.f32 %v2062, 0.0
      %v2071 = vmax.f32 %v2063, 0.0
      %v2072 = vmax.f32 %v2064, 0.0
      %v2073 = vmax.f32 %v2065, 0.0
      %v2074 = vmax.f32 %v2066, 0.0
      %v2075 = vmax.f32 %v2067, 0.0
      %v2076 = vmax.f32 %v2068, 0.0
      %v2077 = vmax.f32 %v2069, 0.0
      %2078 = vst [vmem:[%s335] sm:$0xff] %v2070
      %2079 = vst [vmem:[%s335 + $0x8] sm:$0xff] %v2071
      %2080 = vst [vmem:[%s335 + $0x10] sm:$0xff] %v2072
      %2081 = vst [vmem:[%s335 + $0x18] sm:$0xff] %v2073
      %2082 = vst [vmem:[%s335 + $0x20] sm:$0xff] %v2074
      %2083 = vst [vmem:[%s335 + $0x28] sm:$0xff] %v2075
      %2084 = vst [vmem:[%s335 + $0x30] sm:$0xff] %v2076
      %2085 = vst [vmem:[%s335 + $0x38] sm:$0xff] %v2077
      %s2086 = smul.u32 8, %s26
      %p2087 = scmp.lt.s32.totalorder %s25, 1
      %s2088 = scalar_select %p2087, %s25, 1
      %p2089 = scmp.lt.s32.totalorder %s2086, 7
      %s2090 = scalar_select %p2089, %s2086, 7
      %s2091 = smul.addr %s2088, 8
      %s2092 = sadd.s32 %s2090, %s2091
      %s2093 = smul.addr %s2092, 8
      %s2094 = scalar_lea.vmem %s10, %s2093
      // Predicated region
      $region94: #{bottleneck_forward.1} parent=55 // pred_check
        %p2095 = pneg %p242
      $region95: #{bottleneck_forward.1} parent=55 // pred_check_branch
        %2097 = sbr.rel (%p2095) target = $region97
      $region96: #{bottleneck_forward.1} parent=55 // pred_region
        %s2098 = smul.u32 8, %s26
      $region97: #{bottleneck_forward.1} parent=55 // pred_fallthru
        _
    $region56: #{bottleneck_forward.1} parent=5 // pred_fallthru
      _
    %p2099 = scmp.le.s32.totalorder 2, %s16
    // Predicated region
    $region98: #{bottleneck_forward.1} parent=5 // pred_check
      %p2100 = pneg %p2099
    $region99: #{bottleneck_forward.1} parent=5 // pred_check_branch
      %2102 = sbr.rel (%p2100) target = $region101
    $region100: #{bottleneck_forward.1} parent=5 // pred_region
      %s2103 = ssub.s32 %s16, 2
      // Predicated region
      $region102: #{bottleneck_forward.1} parent=100 // pred_check
        %p2104 = pneg %p248
      $region103: #{bottleneck_forward.1} parent=100 // pred_check_branch
        %2106 = sbr.rel (%p2104) target = $region105
      $region104: #{bottleneck_forward.1} parent=100 // pred_region
        %s2107 = smul.u32 8, %s28
        %p2108 = scmp.lt.s32.totalorder %s27, 1
        %s2109 = scalar_select %p2108, %s27, 1
        %p2110 = scmp.lt.s32.totalorder %s2107, 7
        %s2111 = scalar_select %p2110, %s2107, 7
        %s2112 = smul.addr %s2109, 8
        %s2113 = sadd.s32 %s2111, %s2112
        %s2114 = smul.addr %s2113, 8
        %s2115 = scalar_lea.vmem %s10, %s2114
      $region105: #{bottleneck_forward.1} parent=100 // pred_fallthru
        _
    $region101: #{bottleneck_forward.1} parent=5 // pred_fallthru
      _
  $region6: #{bottleneck_forward.1} parent=0 // loop_footer
    %s20 = sadd.s32 1, %s16
  $region7: #{bottleneck_forward.1} parent=0 // loop_footer_branch
    %15 = sbr.rel target = $region3
  $region8: #{bottleneck_forward.1} parent=0 // loop_exit
    _
  %2116 = vsyncmov [#allocation4]
  %s2117 = vpop.sfrf %2116
  %p2118 = scmp.eq.s32.totalorder %s2117, 0
  %p2119 = pneg %p2118
  %2121 = shalt.err (%p2119)

</llo_original>
